<compile_context>
chip_gen: v7x
topology: tpu7x:2x2x1
jax: 0.10.0
libtpu: 0.0.40
codegen_flags: <defaults>
</compile_context>

<pallas_src>
import math
import functools

import jax
import jax.numpy as jnp
from jax import lax
from jax.experimental import pallas as pl
from jax.experimental.pallas import tpu as pltpu

GROUPS = 32      # norm_layer(channels) == nn.GroupNorm(32, channels)
EPS = 1e-5       # PyTorch GroupNorm default eps
LANE = 128


def _round_up(x, m):
    return (x + m - 1) // m * m


def _pick_tile(hw_pad, preferred):
    for t in (1024, 512, 256, 128):
        if t <= preferred and t <= hw_pad and hw_pad % t == 0:
            return t
    return hw_pad


# --------------------------------------------------------------------------------------
# Kernel 1: GroupNorm + head-major q/k/v 1x1 convs, one batch element per grid step.
# --------------------------------------------------------------------------------------
def _norm_qkv_kernel(x_ref, gamma_ref, beta_ref, member_ref, memberT_ref,
                     wq_ref, wk_ref, wv_ref,
                     xn_ref, q_ref, k_ref, v_ref, *, hw_true, num_heads):
    C = x_ref.shape[1]
    hw_pad = x_ref.shape[2]
    ch = C // num_heads
    x = x_ref[0]                                                  # (C, HW_pad) f32

    # GroupNorm stats: per-channel lane reductions, then two tiny membership matmuls
    # (stats stacked so it is 2 matmuls, not 4 N=1 matmuls).
    s1 = jnp.sum(x, axis=-1, keepdims=True)                       # (C, 1)
    s2 = jnp.sum(x * x, axis=-1, keepdims=True)                   # (C, 1)
    stats = jnp.concatenate([s1, s2], axis=-1)                    # (C, 2)
    inv_n = 1.0 / float((C // GROUPS) * hw_true)                  # padded lanes are zero
    g = jnp.dot(member_ref[...], stats,
                preferred_element_type=jnp.float32) * inv_n       # (G, 2)
    g_mean = g[:, 0:1]
    g_rstd = lax.rsqrt(g[:, 1:2] - g_mean * g_mean + EPS)         # (G, 1)
    gpack = jnp.concatenate([g_mean, g_rstd], axis=-1)            # (G, 2)
    cpack = jnp.dot(memberT_ref[...], gpack,
                    preferred_element_type=jnp.float32)           # (C, 2)
    ch_mean = cpack[:, 0:1]
    ch_rstd = cpack[:, 1:2]

    scale = gamma_ref[...] * ch_rstd                              # (C, 1)
    shift = beta_ref[...] - ch_mean * scale                       # (C, 1)
    xn = x * scale + shift                                        # (C, HW_pad) f32
    xn_bf = xn.astype(jnp.bfloat16)
    xn_ref[0] = xn_bf                                             # bf16 inter-kernel tensor

    # q/k/v 1x1 convs: head-major weight rows, bf16 MXU matmuls with f32 accumulation.
    # Scale (1/sqrt(sqrt(head_dim))) already folded into wq/wk rows on the host.
    q = jnp.dot(wq_ref[...], xn_bf, preferred_element_type=jnp.float32)   # (C, HW_pad)
    q_ref[0] = q.astype(jnp.bfloat16).reshape(num_heads, ch, hw_pad)

    k = jnp.dot(wk_ref[...], xn_bf, preferred_element_type=jnp.float32)
    k_ref[0] = k.astype(jnp.bfloat16).reshape(num_heads, ch, hw_pad)

    v = jnp.dot(wv_ref[...], xn_bf, preferred_element_type=jnp.float32).astype(jnp.bfloat16)
    pad_rows = jnp.concatenate(
        [jnp.ones((1, hw_pad), jnp.bfloat16), jnp.zeros((7, hw_pad), jnp.bfloat16)], axis=0)
    for hh in range(num_heads):
        # V padded with 8 rows; row `ch` is ones so P@V_pad's extra row is sum_kv(P).
        v_ref[0, hh] = jnp.concatenate([v[hh * ch:(hh + 1) * ch], pad_rows], axis=0)


# --------------------------------------------------------------------------------------
# Kernel 2: flash attention (online softmax over KV tiles) with per-head accumulation into
#           a head-major (C, tq) scratch, then ONE full-C proj matmul + bias + residual.
# Grid: (batch, q_tile, head, kv_tile); head/kv are reduction ("arbitrary") axes.
# --------------------------------------------------------------------------------------
def _flash_attn_proj_kernel(xn_ref, q_ref, k_ref, v_ref, wproj_ref, bproj_ref,
                            out_ref, m_scr, acc_scr, hacc_scr,
                            *, hw_true, hw_pad, tkv, ch):
    h = pl.program_id(2)
    kv = pl.program_id(3)
    nh = pl.num_programs(2)
    nkv = pl.num_programs(3)

    # Initialize the resident output block once per (batch, q_tile): residual + proj bias.
    @pl.when((h == 0) & (kv == 0))
    def _init_out():
        out_ref[0] = xn_ref[0].astype(jnp.float32) + bproj_ref[...]   # (C, tq) + (C, 1)

    # Reset online-softmax state at the start of each head's KV loop.
    @pl.when(kv == 0)
    def _init_softmax():
        m_scr[...] = jnp.full(m_scr.shape, -jnp.inf, jnp.float32)
        acc_scr[...] = jnp.zeros(acc_scr.shape, jnp.float32)

    q = q_ref[0, 0]                                               # (ch,   tq)  bf16
    k = k_ref[0, 0]                                               # (ch,   tkv) bf16
    v = v_ref[0, 0]                                               # (ch+8, tkv) bf16 (row ch = 1)

    # scores s[s_kv, t] = sum_c k[c, s_kv] * q[c, t]  (scale already folded into q/k weights)
    s = lax.dot_general(k, q, (((0,), (0,)), ((), ())),
                        preferred_element_type=jnp.float32)       # (tkv, tq) f32
    if hw_pad != hw_true:                                         # static: only if padded
        key_ids = kv * tkv + lax.broadcasted_iota(jnp.int32, s.shape, 0)
        s = jnp.where(key_ids < hw_true, s, -1e30)

    m_prev = m_scr[...]                                           # (1, tq)
    m_new = jnp.maximum(m_prev, jnp.max(s, axis=0, keepdims=True))
    alpha = jnp.exp(m_prev - m_new)                               # (1, tq)
    p = jnp.exp(s - m_new)                                        # (tkv, tq) f32
    # V's ones-row makes acc row `ch` the running softmax denominator (MXU, no sublane sum).
    acc_scr[...] = alpha * acc_scr[...] + jnp.dot(
        v, p.astype(jnp.bfloat16), preferred_element_type=jnp.float32)   # (ch+8, tq) f32
    m_scr[...] = m_new

    # End of this head's KV loop: normalize and drop it into its head-major slice.
    @pl.when(kv == nkv - 1)
    def _finalize_head():
        l = acc_scr[ch:ch + 1, :]                                 # (1, tq) = sum_kv p
        inv_l = pl.reciprocal(l)                                  # exact (runs once per head)
        hacc_scr[pl.ds(pl.multiple_of(h * ch, 8), ch), :] = acc_scr[0:ch, :] * inv_l

    # Very last step for this (batch, q_tile): one full-C proj matmul onto the output block.
    @pl.when((kv == nkv - 1) & (h == nh - 1))
    def _proj_residual():
        out_ref[0] = out_ref[0] + jnp.dot(
            wproj_ref[...], hacc_scr[...].astype(jnp.bfloat16),
            preferred_element_type=jnp.float32)                   # (C, tq) f32


# --------------------------------------------------------------------------------------
# Wrapper
# --------------------------------------------------------------------------------------
def attention_block(x, params, num_heads=1):
    """x: (B, C, H, W) float32, NCHW like the PyTorch module."""
    B, C, H, W = x.shape
    assert C % GROUPS == 0 and C % num_heads == 0
    ch = C // num_heads
    assert ch % 8 == 0, "head_dim must be a multiple of 8 for aligned sublane slices"
    HW = H * W
    hw_pad = max(_round_up(HW, LANE), LANE)        # lane-dense, 128-aligned spatial axis
    tq = _pick_tile(hw_pad, 512)
    tkv = _pick_tile(hw_pad, 1024)

    xf = x.reshape(B, C, HW).astype(jnp.float32)
    if hw_pad != HW:
        xf = jnp.pad(xf, ((0, 0), (0, 0), (0, hw_pad - HW)))

    gamma = params["gamma"].reshape(C, 1).astype(jnp.float32)
    beta = params["beta"].reshape(C, 1).astype(jnp.float32)

    # Group-membership matrices (hoisted out of the kernel).
    cg = C // GROUPS
    member = (jnp.arange(C)[None, :] // cg ==
              jnp.arange(GROUPS)[:, None]).astype(jnp.float32)    # (G, C)
    memberT = member.T                                            # (C, G)

    # Head-major row gather of the qkv weight + q/k scale folding (host side).
    scale = 1.0 / math.sqrt(math.sqrt(ch))
    w3 = params["wqkv"].reshape(num_heads, 3, ch, C).astype(jnp.float32)
    wq = (w3[:, 0] * scale).reshape(C, C).astype(jnp.bfloat16)
    wk = (w3[:, 1] * scale).reshape(C, C).astype(jnp.bfloat16)
    wv = w3[:, 2].reshape(C, C).astype(jnp.bfloat16)

    wproj = params["wproj"].reshape(C, C).astype(jnp.bfloat16)    # head-major == natural order
    bproj = params["bproj"].reshape(C, 1).astype(jnp.float32)

    # ---------------- kernel 1: GroupNorm + qkv ----------------
    norm_qkv_fn = functools.partial(_norm_qkv_kernel, hw_true=HW, num_heads=num_heads)
    xn, qh, kh, vh = pl.pallas_call(
        norm_qkv_fn,
        out_shape=(
            jax.ShapeDtypeStruct((B, C, hw_pad), jnp.bfloat16),
            jax.ShapeDtypeStruct((B, num_heads, ch, hw_pad), jnp.bfloat16),
            jax.ShapeDtypeStruct((B, num_heads, ch, hw_pad), jnp.bfloat16),
            jax.ShapeDtypeStruct((B, num_heads, ch + 8, hw_pad), jnp.bfloat16),
        ),
        grid_spec=pltpu.PrefetchScalarGridSpec(
            num_scalar_prefetch=0,
            grid=(B,),
            in_specs=[
                pl.BlockSpec((1, C, hw_pad), lambda b: (b, 0, 0)),
                pl.BlockSpec((C, 1), lambda b: (0, 0)),
                pl.BlockSpec((C, 1), lambda b: (0, 0)),
                pl.BlockSpec((GROUPS, C), lambda b: (0, 0)),
                pl.BlockSpec((C, GROUPS), lambda b: (0, 0)),
                pl.BlockSpec((C, C), lambda b: (0, 0)),
                pl.BlockSpec((C, C), lambda b: (0, 0)),
                pl.BlockSpec((C, C), lambda b: (0, 0)),
            ],
            out_specs=(
                pl.BlockSpec((1, C, hw_pad), lambda b: (b, 0, 0)),
                pl.BlockSpec((1, num_heads, ch, hw_pad), lambda b: (b, 0, 0, 0)),
                pl.BlockSpec((1, num_heads, ch, hw_pad), lambda b: (b, 0, 0, 0)),
                pl.BlockSpec((1, num_heads, ch + 8, hw_pad), lambda b: (b, 0, 0, 0)),
            ),
        ),
        compiler_params=pltpu.CompilerParams(
            dimension_semantics=("parallel",),
            vmem_limit_bytes=32 * 1024 * 1024,
        ),
    )(xf, gamma, beta, member, memberT, wq, wk, wv)

    # ---------------- kernel 2: flash attention + fused proj + residual ----------------
    nq = hw_pad // tq
    nkv = hw_pad // tkv
    attn_fn = functools.partial(_flash_attn_proj_kernel,
                                hw_true=HW, hw_pad=hw_pad, tkv=tkv, ch=ch)
    out = pl.pallas_call(
        attn_fn,
        out_shape=jax.ShapeDtypeStruct((B, C, hw_pad), jnp.float32),
        grid_spec=pltpu.PrefetchScalarGridSpec(
            num_scalar_prefetch=0,
            grid=(B, nq, num_heads, nkv),
            in_specs=[
                pl.BlockSpec((1, C, tq), lambda b, qi, h, kv: (b, 0, qi)),           # xn (bf16)
                pl.BlockSpec((1, 1, ch, tq), lambda b, qi, h, kv: (b, h, 0, qi)),    # q
                pl.BlockSpec((1, 1, ch, tkv), lambda b, qi, h, kv: (b, h, 0, kv)),   # k
                pl.BlockSpec((1, 1, ch + 8, tkv), lambda b, qi, h, kv: (b, h, 0, kv)),  # v+ones
                pl.BlockSpec((C, C), lambda b, qi, h, kv: (0, 0)),                   # wproj
                pl.BlockSpec((C, 1), lambda b, qi, h, kv: (0, 0)),                   # bproj
            ],
            out_specs=pl.BlockSpec((1, C, tq), lambda b, qi, h, kv: (b, 0, qi)),
            scratch_shapes=[
                pltpu.VMEM((1, tq), jnp.float32),        # running max m
                pltpu.VMEM((ch + 8, tq), jnp.float32),   # per-head acc (+ denom row)
                pltpu.VMEM((C, tq), jnp.float32),        # head-major attention output
            ],
        ),
        compiler_params=pltpu.CompilerParams(
            dimension_semantics=("parallel", "parallel", "arbitrary", "arbitrary"),
            vmem_limit_bytes=32 * 1024 * 1024,
        ),
    )(xn, qh, kh, vh, wproj, bproj)

    if hw_pad != HW:
        out = out[:, :, :HW]
    return out.reshape(B, C, H, W)


# --------------------------------------------------------------------------------------
# Pure-JAX reference mirroring the PyTorch forward, for a sanity check.
# --------------------------------------------------------------------------------------
def _reference(x, params, num_heads):
    B, C, H, W = x.shape
    xr = x.reshape(B, GROUPS, (C // GROUPS) * H * W)
    mean = xr.mean(axis=-1, keepdims=True)
    var = ((xr - mean) ** 2).mean(axis=-1, keepdims=True)
    xn = ((xr - mean) / jnp.sqrt(var + EPS)).reshape(B, C, H, W)
    xn = xn * params["gamma"][None, :, None, None] + params["beta"][None, :, None, None]
    qkv = jnp.einsum('oc,bchw->bohw', params["wqkv"], xn)
    qkv = qkv.reshape(B * num_heads, -1, H * W)
    q, k, v = jnp.split(qkv, 3, axis=1)
    scale = 1.0 / math.sqrt(math.sqrt(C // num_heads))
    attn = jnp.einsum('bct,bcs->bts', q * scale, k * scale)
    attn = jax.nn.softmax(attn, axis=-1)
    h = jnp.einsum('bts,bcs->bct', attn, v).reshape(B, C, H, W)
    h = jnp.einsum('oc,bchw->bohw', params["wproj"], h) + params["bproj"][None, :, None, None]
    return xn + h


if __name__ == "__main__":
    # channels must be divisible by 32 (GroupNorm(32, C)) and by num_heads.
    B, C, H, W = 2, 64, 16, 16     # HW = 256 -> lane-dense 128-aligned tiles
    num_heads = 2                  # head_dim = 32 (multiple of 8)

    key = jax.random.PRNGKey(0)
    kx, kg, kb, kq, kp, kbp = jax.random.split(key, 6)
    x = jax.random.normal(kx, (B, C, H, W), jnp.float32)
    params = {
        "gamma": 1.0 + 0.1 * jax.random.normal(kg, (C,), jnp.float32),
        "beta": 0.1 * jax.random.normal(kb, (C,), jnp.float32),
        # Conv2d(C, 3C, 1, bias=False) weight, squeezed from (3C, C, 1, 1)
        "wqkv": jax.random.normal(kq, (3 * C, C), jnp.float32) / math.sqrt(C),
        # Conv2d(C, C, 1) weight + bias
        "wproj": jax.random.normal(kp, (C, C), jnp.float32) / math.sqrt(C),
        "bproj": 0.1 * jax.random.normal(kbp, (C,), jnp.float32),
    }

    out = attention_block(x, params, num_heads=num_heads)
    jax.block_until_ready(out)

    ref = _reference(x, params, num_heads)
    assert out.shape == x.shape
    max_err = float(jnp.max(jnp.abs(out - ref)))
    # bf16 matmuls / bf16 inter-kernel xn with f32 accumulation: loose tolerance vs pure f32.
    assert bool(jnp.allclose(out, ref, atol=2.5e-2, rtol=2.5e-2)), f"max abs err {max_err}"
    print("KERNEL_OK")
</pallas_src>

<mosaic_0001>
module attributes {stable_mosaic.version = 11 : i64} {
  func.func @_norm_qkv_kernel(%arg0: i32, %arg1: memref<1x64x256xf32, #tpu.memory_space<vmem>>, %arg2: memref<64x1xf32, #tpu.memory_space<vmem>>, %arg3: memref<64x1xf32, #tpu.memory_space<vmem>>, %arg4: memref<32x64xf32, #tpu.memory_space<vmem>>, %arg5: memref<64x32xf32, #tpu.memory_space<vmem>>, %arg6: memref<64x64xbf16, #tpu.memory_space<vmem>>, %arg7: memref<64x64xbf16, #tpu.memory_space<vmem>>, %arg8: memref<64x64xbf16, #tpu.memory_space<vmem>>, %arg9: memref<1x64x256xbf16, #tpu.memory_space<vmem>>, %arg10: memref<1x2x32x256xbf16, #tpu.memory_space<vmem>>, %arg11: memref<1x2x32x256xbf16, #tpu.memory_space<vmem>>, %arg12: memref<1x2x40x256xbf16, #tpu.memory_space<vmem>>) attributes {dimension_semantics = [#tpu.dimension_semantics<parallel>], iteration_bounds = array<i64: 2>, scalar_prefetch = 0 : i64, scratch_operands = 0 : i64, tpu.core_type = #tpu.core_type<tc>, window_params = [{transform_indices = @transform_0, window_bounds = array<i64: 1, 64, 256>}, {pipeline_mode = #tpu.pipeline_mode<synchronous>, transform_indices = @transform_1, window_bounds = array<i64: 64, 1>}, {pipeline_mode = #tpu.pipeline_mode<synchronous>, transform_indices = @transform_2, window_bounds = array<i64: 64, 1>}, {pipeline_mode = #tpu.pipeline_mode<synchronous>, transform_indices = @transform_3, window_bounds = array<i64: 32, 64>}, {pipeline_mode = #tpu.pipeline_mode<synchronous>, transform_indices = @transform_4, window_bounds = array<i64: 64, 32>}, {pipeline_mode = #tpu.pipeline_mode<synchronous>, transform_indices = @transform_5, window_bounds = array<i64: 64, 64>}, {pipeline_mode = #tpu.pipeline_mode<synchronous>, transform_indices = @transform_6, window_bounds = array<i64: 64, 64>}, {pipeline_mode = #tpu.pipeline_mode<synchronous>, transform_indices = @transform_7, window_bounds = array<i64: 64, 64>}, {transform_indices = @transform_8, window_bounds = array<i64: 1, 64, 256>}, {transform_indices = @transform_9, window_bounds = array<i64: 1, 2, 32, 256>}, {transform_indices = @transform_10, window_bounds = array<i64: 1, 2, 32, 256>}, {transform_indices = @transform_11, window_bounds = array<i64: 1, 2, 40, 256>}]} {
    %c0 = arith.constant 0 : index
    %c0_0 = arith.constant 0 : index
    %c0_1 = arith.constant 0 : index
    %0 = vector.load %arg1[%c0, %c0_0, %c0_1] : memref<1x64x256xf32, #tpu.memory_space<vmem>>, vector<1x64x256xf32>
    %1 = vector.shape_cast %0 : vector<1x64x256xf32> to vector<64x256xf32>
    %cst = arith.constant dense<0.000000e+00> : vector<64xf32>
    %2 = vector.multi_reduction <add>, %1, %cst [1] : vector<64x256xf32> to vector<64xf32>
    %3 = vector.shape_cast %2 : vector<64xf32> to vector<64x1xf32>
    %4 = arith.mulf %1, %1 : vector<64x256xf32>
    %cst_2 = arith.constant dense<0.000000e+00> : vector<64xf32>
    %5 = vector.multi_reduction <add>, %4, %cst_2 [1] : vector<64x256xf32> to vector<64xf32>
    %6 = vector.shape_cast %5 : vector<64xf32> to vector<64x1xf32>
    %7 = tpu.concatenate %3, %6 in 1 : vector<64x1xf32>, vector<64x1xf32> -> vector<64x2xf32>
    %c0_3 = arith.constant 0 : index
    %c0_4 = arith.constant 0 : index
    %8 = vector.load %arg4[%c0_3, %c0_4] : memref<32x64xf32, #tpu.memory_space<vmem>>, vector<32x64xf32>
    %cst_5 = arith.constant dense<0.000000e+00> : vector<32x2xf32>
    %9 = tpu.matmul %8, %7, %cst_5 {dimension_numbers = #tpu.dot_dimension_numbers<[1], [0], [0], [1], [0, 0, 1, 1], [], []>} : vector<32x64xf32>, vector<64x2xf32>, vector<32x2xf32> -> vector<32x2xf32>
    %cst_6 = arith.constant 0.001953125 : f32
    %10 = vector.broadcast %cst_6 : f32 to vector<32x2xf32>
    %11 = arith.mulf %9, %10 : vector<32x2xf32>
    %12 = vector.extract_strided_slice %11 {offsets = [0, 0], sizes = [32, 1], strides = [1, 1]} : vector<32x2xf32> to vector<32x1xf32>
    %13 = vector.extract_strided_slice %11 {offsets = [0, 1], sizes = [32, 1], strides = [1, 1]} : vector<32x2xf32> to vector<32x1xf32>
    %14 = arith.mulf %12, %12 : vector<32x1xf32>
    %15 = arith.subf %13, %14 : vector<32x1xf32>
    %cst_7 = arith.constant 9.99999974E-6 : f32
    %16 = vector.broadcast %cst_7 : f32 to vector<32x1xf32>
    %17 = arith.addf %15, %16 : vector<32x1xf32>
    %18 = math.rsqrt %17 : vector<32x1xf32>
    %19 = tpu.concatenate %12, %18 in 1 : vector<32x1xf32>, vector<32x1xf32> -> vector<32x2xf32>
    %c0_8 = arith.constant 0 : index
    %c0_9 = arith.constant 0 : index
    %20 = vector.load %arg5[%c0_8, %c0_9] : memref<64x32xf32, #tpu.memory_space<vmem>>, vector<64x32xf32>
    %cst_10 = arith.constant dense<0.000000e+00> : vector<64x2xf32>
    %21 = tpu.matmul %20, %19, %cst_10 {dimension_numbers = #tpu.dot_dimension_numbers<[1], [0], [0], [1], [0, 0, 1, 1], [], []>} : vector<64x32xf32>, vector<32x2xf32>, vector<64x2xf32> -> vector<64x2xf32>
    %22 = vector.extract_strided_slice %21 {offsets = [0, 0], sizes = [64, 1], strides = [1, 1]} : vector<64x2xf32> to vector<64x1xf32>
    %23 = vector.extract_strided_slice %21 {offsets = [0, 1], sizes = [64, 1], strides = [1, 1]} : vector<64x2xf32> to vector<64x1xf32>
    %c0_11 = arith.constant 0 : index
    %c0_12 = arith.constant 0 : index
    %24 = vector.load %arg2[%c0_11, %c0_12] : memref<64x1xf32, #tpu.memory_space<vmem>>, vector<64x1xf32>
    %25 = arith.mulf %24, %23 : vector<64x1xf32>
    %c0_13 = arith.constant 0 : index
    %c0_14 = arith.constant 0 : index
    %26 = vector.load %arg3[%c0_13, %c0_14] : memref<64x1xf32, #tpu.memory_space<vmem>>, vector<64x1xf32>
    %27 = arith.mulf %22, %25 : vector<64x1xf32>
    %28 = arith.subf %26, %27 : vector<64x1xf32>
    %29 = vector.broadcast %25 : vector<64x1xf32> to vector<64x256xf32>
    %30 = arith.mulf %1, %29 : vector<64x256xf32>
    %31 = vector.broadcast %28 : vector<64x1xf32> to vector<64x256xf32>
    %32 = arith.addf %30, %31 : vector<64x256xf32>
    %33 = arith.truncf %32 : vector<64x256xf32> to vector<64x256xbf16>
    %c0_15 = arith.constant 0 : index
    %c0_16 = arith.constant 0 : index
    %c0_17 = arith.constant 0 : index
    %34 = vector.load %arg9[%c0_15, %c0_16, %c0_17] : memref<1x64x256xbf16, #tpu.memory_space<vmem>>, vector<1x64x256xbf16>
    %35 = vector.shape_cast %34 : vector<1x64x256xbf16> to vector<64x256xbf16>
    %36 = vector.shape_cast %33 : vector<64x256xbf16> to vector<1x64x256xbf16>
    tpu.vector_store %arg9[%c0_15, %c0_16, %c0_17], %36 {strides = array<i32>} : memref<1x64x256xbf16, #tpu.memory_space<vmem>>, vector<1x64x256xbf16>,
    %c0_18 = arith.constant 0 : index
    %c0_19 = arith.constant 0 : index
    %37 = vector.load %arg6[%c0_18, %c0_19] : memref<64x64xbf16, #tpu.memory_space<vmem>>, vector<64x64xbf16>
    %cst_20 = arith.constant dense<0.000000e+00> : vector<64x256xf32>
    %38 = tpu.matmul %37, %33, %cst_20 {dimension_numbers = #tpu.dot_dimension_numbers<[1], [0], [0], [1], [0, 0, 1, 1], [], []>} : vector<64x64xbf16>, vector<64x256xbf16>, vector<64x256xf32> -> vector<64x256xf32>
    %39 = arith.truncf %38 : vector<64x256xf32> to vector<64x256xbf16>
    %40 = vector.shape_cast %39 : vector<64x256xbf16> to vector<2x32x256xbf16>
    %c0_21 = arith.constant 0 : index
    %c0_22 = arith.constant 0 : index
    %c0_23 = arith.constant 0 : index
    %c0_24 = arith.constant 0 : index
    %41 = vector.load %arg10[%c0_21, %c0_22, %c0_23, %c0_24] : memref<1x2x32x256xbf16, #tpu.memory_space<vmem>>, vector<1x2x32x256xbf16>
    %42 = vector.shape_cast %41 : vector<1x2x32x256xbf16> to vector<2x32x256xbf16>
    %43 = vector.shape_cast %40 : vector<2x32x256xbf16> to vector<1x2x32x256xbf16>
    tpu.vector_store %arg10[%c0_21, %c0_22, %c0_23, %c0_24], %43 {strides = array<i32>} : memref<1x2x32x256xbf16, #tpu.memory_space<vmem>>, vector<1x2x32x256xbf16>,
    %c0_25 = arith.constant 0 : index
    %c0_26 = arith.constant 0 : index
    %44 = vector.load %arg7[%c0_25, %c0_26] : memref<64x64xbf16, #tpu.memory_space<vmem>>, vector<64x64xbf16>
    %cst_27 = arith.constant dense<0.000000e+00> : vector<64x256xf32>
    %45 = tpu.matmul %44, %33, %cst_27 {dimension_numbers = #tpu.dot_dimension_numbers<[1], [0], [0], [1], [0, 0, 1, 1], [], []>} : vector<64x64xbf16>, vector<64x256xbf16>, vector<64x256xf32> -> vector<64x256xf32>
    %46 = arith.truncf %45 : vector<64x256xf32> to vector<64x256xbf16>
    %47 = vector.shape_cast %46 : vector<64x256xbf16> to vector<2x32x256xbf16>
    %c0_28 = arith.constant 0 : index
    %c0_29 = arith.constant 0 : index
    %c0_30 = arith.constant 0 : index
    %c0_31 = arith.constant 0 : index
    %48 = vector.load %arg11[%c0_28, %c0_29, %c0_30, %c0_31] : memref<1x2x32x256xbf16, #tpu.memory_space<vmem>>, vector<1x2x32x256xbf16>
    %49 = vector.shape_cast %48 : vector<1x2x32x256xbf16> to vector<2x32x256xbf16>
    %50 = vector.shape_cast %47 : vector<2x32x256xbf16> to vector<1x2x32x256xbf16>
    tpu.vector_store %arg11[%c0_28, %c0_29, %c0_30, %c0_31], %50 {strides = array<i32>} : memref<1x2x32x256xbf16, #tpu.memory_space<vmem>>, vector<1x2x32x256xbf16>,
    %c0_32 = arith.constant 0 : index
    %c0_33 = arith.constant 0 : index
    %51 = vector.load %arg8[%c0_32, %c0_33] : memref<64x64xbf16, #tpu.memory_space<vmem>>, vector<64x64xbf16>
    %cst_34 = arith.constant dense<0.000000e+00> : vector<64x256xf32>
    %52 = tpu.matmul %51, %33, %cst_34 {dimension_numbers = #tpu.dot_dimension_numbers<[1], [0], [0], [1], [0, 0, 1, 1], [], []>} : vector<64x64xbf16>, vector<64x256xbf16>, vector<64x256xf32> -> vector<64x256xf32>
    %53 = arith.truncf %52 : vector<64x256xf32> to vector<64x256xbf16>
    %cst_35 = arith.constant 1.000000e+00 : bf16
    %54 = vector.broadcast %cst_35 : bf16 to vector<1x256xbf16>
    %cst_36 = arith.constant 0.000000e+00 : bf16
    %55 = vector.broadcast %cst_36 : bf16 to vector<7x256xbf16>
    %56 = tpu.concatenate %54, %55 in 0 : vector<1x256xbf16>, vector<7x256xbf16> -> vector<8x256xbf16>
    %57 = vector.extract_strided_slice %53 {offsets = [0, 0], sizes = [32, 256], strides = [1, 1]} : vector<64x256xbf16> to vector<32x256xbf16>
    %58 = tpu.concatenate %57, %56 in 0 : vector<32x256xbf16>, vector<8x256xbf16> -> vector<40x256xbf16>
    %c0_37 = arith.constant 0 : index
    %c0_38 = arith.constant 0 : index
    %c0_39 = arith.constant 0 : index
    %c0_40 = arith.constant 0 : index
    %59 = vector.load %arg12[%c0_37, %c0_38, %c0_39, %c0_40] : memref<1x2x40x256xbf16, #tpu.memory_space<vmem>>, vector<1x1x40x256xbf16>
    %60 = vector.shape_cast %59 : vector<1x1x40x256xbf16> to vector<40x256xbf16>
    %61 = vector.shape_cast %58 : vector<40x256xbf16> to vector<1x1x40x256xbf16>
    tpu.vector_store %arg12[%c0_37, %c0_38, %c0_39, %c0_40], %61 {strides = array<i32>} : memref<1x2x40x256xbf16, #tpu.memory_space<vmem>>, vector<1x1x40x256xbf16>,
    %62 = vector.extract_strided_slice %53 {offsets = [32, 0], sizes = [32, 256], strides = [1, 1]} : vector<64x256xbf16> to vector<32x256xbf16>
    %63 = tpu.concatenate %62, %56 in 0 : vector<32x256xbf16>, vector<8x256xbf16> -> vector<40x256xbf16>
    %c0_41 = arith.constant 0 : index
    %c1 = arith.constant 1 : index
    %c0_42 = arith.constant 0 : index
    %c0_43 = arith.constant 0 : index
    %64 = vector.load %arg12[%c0_41, %c1, %c0_42, %c0_43] : memref<1x2x40x256xbf16, #tpu.memory_space<vmem>>, vector<1x1x40x256xbf16>
    %65 = vector.shape_cast %64 : vector<1x1x40x256xbf16> to vector<40x256xbf16>
    %66 = vector.shape_cast %63 : vector<40x256xbf16> to vector<1x1x40x256xbf16>
    tpu.vector_store %arg12[%c0_41, %c1, %c0_42, %c0_43], %66 {strides = array<i32>} : memref<1x2x40x256xbf16, #tpu.memory_space<vmem>>, vector<1x1x40x256xbf16>,
    return
  }
  func.func @transform_0(%arg0: i32) -> (i32, i32, i32) {
    %c0_i32 = arith.constant 0 : i32
    %c0_i32_0 = arith.constant 0 : i32
    %c0_i32_1 = arith.constant 0 : i32
    return %arg0, %c0_i32, %c0_i32_0 : i32, i32, i32
  }
  func.func @transform_1(%arg0: i32) -> (i32, i32) {
    %c0_i32 = arith.constant 0 : i32
    %c0_i32_0 = arith.constant 0 : i32
    %c0_i32_1 = arith.constant 0 : i32
    return %c0_i32, %c0_i32_0 : i32, i32
  }
  func.func @transform_2(%arg0: i32) -> (i32, i32) {
    %c0_i32 = arith.constant 0 : i32
    %c0_i32_0 = arith.constant 0 : i32
    %c0_i32_1 = arith.constant 0 : i32
    return %c0_i32, %c0_i32_0 : i32, i32
  }
  func.func @transform_3(%arg0: i32) -> (i32, i32) {
    %c0_i32 = arith.constant 0 : i32
    %c0_i32_0 = arith.constant 0 : i32
    %c0_i32_1 = arith.constant 0 : i32
    return %c0_i32, %c0_i32_0 : i32, i32
  }
  func.func @transform_4(%arg0: i32) -> (i32, i32) {
    %c0_i32 = arith.constant 0 : i32
    %c0_i32_0 = arith.constant 0 : i32
    %c0_i32_1 = arith.constant 0 : i32
    return %c0_i32, %c0_i32_0 : i32, i32
  }
  func.func @transform_5(%arg0: i32) -> (i32, i32) {
    %c0_i32 = arith.constant 0 : i32
    %c0_i32_0 = arith.constant 0 : i32
    %c0_i32_1 = arith.constant 0 : i32
    return %c0_i32, %c0_i32_0 : i32, i32
  }
  func.func @transform_6(%arg0: i32) -> (i32, i32) {
    %c0_i32 = arith.constant 0 : i32
    %c0_i32_0 = arith.constant 0 : i32
    %c0_i32_1 = arith.constant 0 : i32
    return %c0_i32, %c0_i32_0 : i32, i32
  }
  func.func @transform_7(%arg0: i32) -> (i32, i32) {
    %c0_i32 = arith.constant 0 : i32
    %c0_i32_0 = arith.constant 0 : i32
    %c0_i32_1 = arith.constant 0 : i32
    return %c0_i32, %c0_i32_0 : i32, i32
  }
  func.func @transform_8(%arg0: i32) -> (i32, i32, i32) {
    %c0_i32 = arith.constant 0 : i32
    %c0_i32_0 = arith.constant 0 : i32
    %c0_i32_1 = arith.constant 0 : i32
    return %arg0, %c0_i32, %c0_i32_0 : i32, i32, i32
  }
  func.func @transform_9(%arg0: i32) -> (i32, i32, i32, i32) {
    %c0_i32 = arith.constant 0 : i32
    %c0_i32_0 = arith.constant 0 : i32
    %c0_i32_1 = arith.constant 0 : i32
    %c0_i32_2 = arith.constant 0 : i32
    return %arg0, %c0_i32, %c0_i32_0, %c0_i32_1 : i32, i32, i32, i32
  }
  func.func @transform_10(%arg0: i32) -> (i32, i32, i32, i32) {
    %c0_i32 = arith.constant 0 : i32
    %c0_i32_0 = arith.constant 0 : i32
    %c0_i32_1 = arith.constant 0 : i32
    %c0_i32_2 = arith.constant 0 : i32
    return %arg0, %c0_i32, %c0_i32_0, %c0_i32_1 : i32, i32, i32, i32
  }
  func.func @transform_11(%arg0: i32) -> (i32, i32, i32, i32) {
    %c0_i32 = arith.constant 0 : i32
    %c0_i32_0 = arith.constant 0 : i32
    %c0_i32_1 = arith.constant 0 : i32
    %c0_i32_2 = arith.constant 0 : i32
    return %arg0, %c0_i32, %c0_i32_0, %c0_i32_1 : i32, i32, i32, i32
  }
}

</mosaic_0001>

<llo_original>
// kernel: tpu_custom_call.1
$region0: #{tpu_custom_call.1}
  #allocation0 [shape = 'u32[]', space=smem, size = 0x4, offset = 0x4, fixed_abs, tag = 'smem constant byte address 0x4 - core index']
  #allocation1 [shape = 'u32[144,128]{1,0:T(1,128)}', space=vmem, size = 0x12000, scoped, tag = 'internal scratch']
  %s0 = inlined_call_operand.hbm [shape: f32[2,64,256], index: 0, kind: input, shape index: {}]
  %s1 = inlined_call_operand.vmem [shape: f32[64,1], index: 1, kind: input, shape index: {}]
  %s2 = inlined_call_operand.vmem [shape: f32[64,1], index: 2, kind: input, shape index: {}]
  %s3 = inlined_call_operand.vmem [shape: f32[32,64], index: 3, kind: input, shape index: {}]
  %s4 = inlined_call_operand.vmem [shape: f32[64,32], index: 4, kind: input, shape index: {}]
  %s5 = inlined_call_operand.vmem [shape: bf16[64,64], index: 5, kind: input, shape index: {}]
  %s6 = inlined_call_operand.vmem [shape: bf16[64,64], index: 6, kind: input, shape index: {}]
  %s7 = inlined_call_operand.vmem [shape: bf16[64,64], index: 7, kind: input, shape index: {}]
  %s8 = inlined_call_operand.hbm [shape: bf16[2,64,256], index: 8, kind: output, shape index: {0}]
  %s9 = inlined_call_operand.hbm [shape: bf16[2,2,32,256], index: 9, kind: output, shape index: {1}]
  %s10 = inlined_call_operand.hbm [shape: bf16[2,2,32,256], index: 10, kind: output, shape index: {2}]
  %s11 = inlined_call_operand.hbm [shape: bf16[2,2,40,256], index: 11, kind: output, shape index: {3}]
  %12 = xla_tuple %s8, %s9, %s10, %s11
  %s13 = sld [smem:[#allocation0]]
  $region93: #{tpu_custom_call.1} parent=0
    _
  %s15 = ssub.s32 1, %s13
  %s16 = scalar_select 0, %s15, %s13
  $region1: #{tpu_custom_call.1} parent=0
    #allocation2 [shape = 'u8[131072]{0}', space=vmem, size = 0x20000, scoped, tag = 'input window, operand 0']
    #allocation3 [shape = 's32[2]{0}', space=sflag, size = 0x8, scoped, tag = 'scoped memory for tpu_custom_call.1']
    #allocation4 [shape = 's32[2]{0}', space=sflag, size = 0x8, scoped, tag = 'scoped memory for tpu_custom_call.1']
    #allocation5 [shape = 'u8[65536]{0}', space=vmem, size = 0x10000, scoped, tag = 'output window, operand 0']
    #allocation6 [shape = 'u8[65536]{0}', space=vmem, size = 0x10000, scoped, tag = 'output window, operand 1']
    #allocation7 [shape = 's32[2]{0}', space=sflag, size = 0x8, scoped, tag = 'scoped memory for tpu_custom_call.1']
    #allocation8 [shape = 'u8[65536]{0}', space=vmem, size = 0x10000, scoped, tag = 'output window, operand 2']
    #allocation9 [shape = 'u8[81920]{0}', space=vmem, size = 0x14000, scoped, tag = 'output window, operand 3']
    #allocation10 [shape = 's32[2]{0}', space=sflag, size = 0x8, scoped, tag = 'scoped memory for tpu_custom_call.1']
    %17 = vsyncpa [#allocation3], 0
    %s18 = scalar_lea.sflag [#allocation3], 1
    %19 = vsyncpa %s18, 0
    %20 = vsyncpa [#allocation4], 0
    %s21 = scalar_lea.sflag [#allocation4], 1
    %22 = vsyncpa %s21, 0
    %23 = vsyncpa [#allocation7], 0
    %s24 = scalar_lea.sflag [#allocation7], 1
    %25 = vsyncpa %s24, 0
    %26 = vsyncpa [#allocation10], 0
    %s27 = scalar_lea.sflag [#allocation10], 1
    %28 = vsyncpa %s27, 0
    loop: start=0, step=1, limit=4
    $region2: #{tpu_custom_call.1} parent=1 // loop_pre_header
      _
    $region3: #{tpu_custom_call.1} parent=1 // loop_header
      %s30 = sphi 0, %s34
      %p31 = scmp.ge.s32.totalorder %s30, 4
      %s40 = sphi 0, %s42
      %s43 = sphi 0, %s40
      %s44 = sphi 0, %s43
      %s60 = sphi 0, %s44
      %s64 = sphi 0, %s64
      %s66 = sphi 0, %s64
      %s67 = sphi 0, %s66
      %s81 = sphi 0, %s67
      %s85 = sphi 0, %s85
      %s87 = sphi 0, %s85
      %s88 = sphi 0, %s87
      %s102 = sphi 0, %s88
      %s106 = sphi 0, %s106
      %s108 = sphi 0, %s106
      %s109 = sphi 0, %s108
      %s123 = sphi 0, %s109
      %s127 = sphi 0, %s127
      %s129 = sphi 0, %s127
      %s130 = sphi 0, %s129
      %s144 = sphi 0, %s130
      %s148 = sphi 0, %s148
      %s150 = sphi 0, %s148
      %s151 = sphi 0, %s150
      %s165 = sphi 0, %s151
      %s169 = sphi 0, %s169
      %s171 = sphi 0, %s169
      %s172 = sphi 0, %s171
      %s186 = sphi 0, %s172
      %s190 = sphi 0, %s190
      %s192 = sphi 0, %s190
      %s193 = sphi 0, %s192
      %s207 = sphi 0, %s193
      %s213 = sphi 0, %s215
      %s216 = sphi 0, %s213
      %s217 = sphi 0, %s216
      %s233 = sphi 0, %s217
      %s239 = sphi 0, %s241
      %s242 = sphi 0, %s239
      %s243 = sphi 0, %s242
      %s259 = sphi 0, %s243
      %s265 = sphi 0, %s267
      %s268 = sphi 0, %s265
      %s269 = sphi 0, %s268
      %s285 = sphi 0, %s269
      %s291 = sphi 0, %s293
      %s294 = sphi 0, %s291
      %s295 = sphi 0, %s294
      %s311 = sphi 0, %s295
    $region4: #{tpu_custom_call.1} parent=1 // loop_header_branch
      %33 = sbr.rel (%p31) target = $region8
    $region5: #{tpu_custom_call.1} parent=1 // loop_body
      %s35 = ssub.s32 %s30, 1
      %s36 = ssub.s32 %s30, 2
      %s37 = sadd.s32 %s30, 1
      %s38 = ssub.s32 %s30, %s37
      %p39 = scmp.eq.s32.totalorder %s38, 0
      %s41 = sadd.s32 %s40, 1
      %s42 = scalar_select %p39, %s40, %s41
      %p45 = pneg %p39
      %p46 = scmp.eq.s32.totalorder %s30, 1
      %p47 = por %p45, %p46
      %p48 = scmp.ne.s32.totalorder %s40, %s43
      %p49 = scmp.eq.s32.totalorder %s30, 0
      %p50 = por %p48, %p49
      %p51 = scmp.ne.s32.totalorder %s40, %s43
      %p52 = scmp.eq.s32.totalorder %s35, 1
      %p53 = por %p51, %p52
      %p54 = scmp.ne.s32.totalorder %s43, %s44
      %p55 = scmp.eq.s32.totalorder %s35, 0
      %p56 = por %p54, %p55
      %p57 = scmp.ne.s32.totalorder %s43, %s44
      %p58 = scmp.eq.s32.totalorder %s36, 1
      %p59 = por %p57, %p58
      %p61 = scmp.ne.s32.totalorder %s44, %s60
      %p62 = scmp.eq.s32.totalorder %s36, 0
      %p63 = por %p61, %p62
      %s65 = sadd.s32 %s64, 1
      %p68 = scmp.eq.s32.totalorder %s30, 1
      %p69 = scmp.ne.s32.totalorder %s64, %s66
      %p70 = scmp.eq.s32.totalorder %s30, 0
      %p71 = por %p69, %p70
      %p72 = scmp.ne.s32.totalorder %s64, %s66
      %p73 = scmp.eq.s32.totalorder %s35, 1
      %p74 = por %p72, %p73
      %p75 = scmp.ne.s32.totalorder %s66, %s67
      %p76 = scmp.eq.s32.totalorder %s35, 0
      %p77 = por %p75, %p76
      %p78 = scmp.ne.s32.totalorder %s66, %s67
      %p79 = scmp.eq.s32.totalorder %s36, 1
      %p80 = por %p78, %p79
      %p82 = scmp.ne.s32.totalorder %s67, %s81
      %p83 = scmp.eq.s32.totalorder %s36, 0
      %p84 = por %p82, %p83
      %s86 = sadd.s32 %s85, 1
      %p89 = scmp.eq.s32.totalorder %s30, 1
      %p90 = scmp.ne.s32.totalorder %s85, %s87
      %p91 = scmp.eq.s32.totalorder %s30, 0
      %p92 = por %p90, %p91
      %p93 = scmp.ne.s32.totalorder %s85, %s87
      %p94 = scmp.eq.s32.totalorder %s35, 1
      %p95 = por %p93, %p94
      %p96 = scmp.ne.s32.totalorder %s87, %s88
      %p97 = scmp.eq.s32.totalorder %s35, 0
      %p98 = por %p96, %p97
      %p99 = scmp.ne.s32.totalorder %s87, %s88
      %p100 = scmp.eq.s32.totalorder %s36, 1
      %p101 = por %p99, %p100
      %p103 = scmp.ne.s32.totalorder %s88, %s102
      %p104 = scmp.eq.s32.totalorder %s36, 0
      %p105 = por %p103, %p104
      %s107 = sadd.s32 %s106, 1
      %p110 = scmp.eq.s32.totalorder %s30, 1
      %p111 = scmp.ne.s32.totalorder %s106, %s108
      %p112 = scmp.eq.s32.totalorder %s30, 0
      %p113 = por %p111, %p112
      %p114 = scmp.ne.s32.totalorder %s106, %s108
      %p115 = scmp.eq.s32.totalorder %s35, 1
      %p116 = por %p114, %p115
      %p117 = scmp.ne.s32.totalorder %s108, %s109
      %p118 = scmp.eq.s32.totalorder %s35, 0
      %p119 = por %p117, %p118
      %p120 = scmp.ne.s32.totalorder %s108, %s109
      %p121 = scmp.eq.s32.totalorder %s36, 1
      %p122 = por %p120, %p121
      %p124 = scmp.ne.s32.totalorder %s109, %s123
      %p125 = scmp.eq.s32.totalorder %s36, 0
      %p126 = por %p124, %p125
      %s128 = sadd.s32 %s127, 1
      %p131 = scmp.eq.s32.totalorder %s30, 1
      %p132 = scmp.ne.s32.totalorder %s127, %s129
      %p133 = scmp.eq.s32.totalorder %s30, 0
      %p134 = por %p132, %p133
      %p135 = scmp.ne.s32.totalorder %s127, %s129
      %p136 = scmp.eq.s32.totalorder %s35, 1
      %p137 = por %p135, %p136
      %p138 = scmp.ne.s32.totalorder %s129, %s130
      %p139 = scmp.eq.s32.totalorder %s35, 0
      %p140 = por %p138, %p139
      %p141 = scmp.ne.s32.totalorder %s129, %s130
      %p142 = scmp.eq.s32.totalorder %s36, 1
      %p143 = por %p141, %p142
      %p145 = scmp.ne.s32.totalorder %s130, %s144
      %p146 = scmp.eq.s32.totalorder %s36, 0
      %p147 = por %p145, %p146
      %s149 = sadd.s32 %s148, 1
      %p152 = scmp.eq.s32.totalorder %s30, 1
      %p153 = scmp.ne.s32.totalorder %s148, %s150
      %p154 = scmp.eq.s32.totalorder %s30, 0
      %p155 = por %p153, %p154
      %p156 = scmp.ne.s32.totalorder %s148, %s150
      %p157 = scmp.eq.s32.totalorder %s35, 1
      %p158 = por %p156, %p157
      %p159 = scmp.ne.s32.totalorder %s150, %s151
      %p160 = scmp.eq.s32.totalorder %s35, 0
      %p161 = por %p159, %p160
      %p162 = scmp.ne.s32.totalorder %s150, %s151
      %p163 = scmp.eq.s32.totalorder %s36, 1
      %p164 = por %p162, %p163
      %p166 = scmp.ne.s32.totalorder %s151, %s165
      %p167 = scmp.eq.s32.totalorder %s36, 0
      %p168 = por %p166, %p167
      %s170 = sadd.s32 %s169, 1
      %p173 = scmp.eq.s32.totalorder %s30, 1
      %p174 = scmp.ne.s32.totalorder %s169, %s171
      %p175 = scmp.eq.s32.totalorder %s30, 0
      %p176 = por %p174, %p175
      %p177 = scmp.ne.s32.totalorder %s169, %s171
      %p178 = scmp.eq.s32.totalorder %s35, 1
      %p179 = por %p177, %p178
      %p180 = scmp.ne.s32.totalorder %s171, %s172
      %p181 = scmp.eq.s32.totalorder %s35, 0
      %p182 = por %p180, %p181
      %p183 = scmp.ne.s32.totalorder %s171, %s172
      %p184 = scmp.eq.s32.totalorder %s36, 1
      %p185 = por %p183, %p184
      %p187 = scmp.ne.s32.totalorder %s172, %s186
      %p188 = scmp.eq.s32.totalorder %s36, 0
      %p189 = por %p187, %p188
      %s191 = sadd.s32 %s190, 1
      %p194 = scmp.eq.s32.totalorder %s30, 1
      %p195 = scmp.ne.s32.totalorder %s190, %s192
      %p196 = scmp.eq.s32.totalorder %s30, 0
      %p197 = por %p195, %p196
      %p198 = scmp.ne.s32.totalorder %s190, %s192
      %p199 = scmp.eq.s32.totalorder %s35, 1
      %p200 = por %p198, %p199
      %p201 = scmp.ne.s32.totalorder %s192, %s193
      %p202 = scmp.eq.s32.totalorder %s35, 0
      %p203 = por %p201, %p202
      %p204 = scmp.ne.s32.totalorder %s192, %s193
      %p205 = scmp.eq.s32.totalorder %s36, 1
      %p206 = por %p204, %p205
      %p208 = scmp.ne.s32.totalorder %s193, %s207
      %p209 = scmp.eq.s32.totalorder %s36, 0
      %p210 = por %p208, %p209
      %s211 = ssub.s32 %s30, %s37
      %p212 = scmp.eq.s32.totalorder %s211, 0
      %s214 = sadd.s32 %s213, 1
      %s215 = scalar_select %p212, %s213, %s214
      %p218 = pneg %p212
      %p219 = scmp.eq.s32.totalorder %s30, 1
      %p220 = por %p218, %p219
      %p221 = scmp.ne.s32.totalorder %s213, %s216
      %p222 = scmp.eq.s32.totalorder %s30, 0
      %p223 = por %p221, %p222
      %p224 = scmp.ne.s32.totalorder %s213, %s216
      %p225 = scmp.eq.s32.totalorder %s35, 1
      %p226 = por %p224, %p225
      %p227 = scmp.ne.s32.totalorder %s216, %s217
      %p228 = scmp.eq.s32.totalorder %s35, 0
      %p229 = por %p227, %p228
      %p230 = scmp.ne.s32.totalorder %s216, %s217
      %p231 = scmp.eq.s32.totalorder %s36, 1
      %p232 = por %p230, %p231
      %p234 = scmp.ne.s32.totalorder %s217, %s233
      %p235 = scmp.eq.s32.totalorder %s36, 0
      %p236 = por %p234, %p235
      %s237 = ssub.s32 %s30, %s37
      %p238 = scmp.eq.s32.totalorder %s237, 0
      %s240 = sadd.s32 %s239, 1
      %s241 = scalar_select %p238, %s239, %s240
      %p244 = pneg %p238
      %p245 = scmp.eq.s32.totalorder %s30, 1
      %p246 = por %p244, %p245
      %p247 = scmp.ne.s32.totalorder %s239, %s242
      %p248 = scmp.eq.s32.totalorder %s30, 0
      %p249 = por %p247, %p248
      %p250 = scmp.ne.s32.totalorder %s239, %s242
      %p251 = scmp.eq.s32.totalorder %s35, 1
      %p252 = por %p250, %p251
      %p253 = scmp.ne.s32.totalorder %s242, %s243
      %p254 = scmp.eq.s32.totalorder %s35, 0
      %p255 = por %p253, %p254
      %p256 = scmp.ne.s32.totalorder %s242, %s243
      %p257 = scmp.eq.s32.totalorder %s36, 1
      %p258 = por %p256, %p257
      %p260 = scmp.ne.s32.totalorder %s243, %s259
      %p261 = scmp.eq.s32.totalorder %s36, 0
      %p262 = por %p260, %p261
      %s263 = ssub.s32 %s30, %s37
      %p264 = scmp.eq.s32.totalorder %s263, 0
      %s266 = sadd.s32 %s265, 1
      %s267 = scalar_select %p264, %s265, %s266
      %p270 = pneg %p264
      %p271 = scmp.eq.s32.totalorder %s30, 1
      %p272 = por %p270, %p271
      %p273 = scmp.ne.s32.totalorder %s265, %s268
      %p274 = scmp.eq.s32.totalorder %s30, 0
      %p275 = por %p273, %p274
      %p276 = scmp.ne.s32.totalorder %s265, %s268
      %p277 = scmp.eq.s32.totalorder %s35, 1
      %p278 = por %p276, %p277
      %p279 = scmp.ne.s32.totalorder %s268, %s269
      %p280 = scmp.eq.s32.totalorder %s35, 0
      %p281 = por %p279, %p280
      %p282 = scmp.ne.s32.totalorder %s268, %s269
      %p283 = scmp.eq.s32.totalorder %s36, 1
      %p284 = por %p282, %p283
      %p286 = scmp.ne.s32.totalorder %s269, %s285
      %p287 = scmp.eq.s32.totalorder %s36, 0
      %p288 = por %p286, %p287
      %s289 = ssub.s32 %s30, %s37
      %p290 = scmp.eq.s32.totalorder %s289, 0
      %s292 = sadd.s32 %s291, 1
      %s293 = scalar_select %p290, %s291, %s292
      %p296 = pneg %p290
      %p297 = scmp.eq.s32.totalorder %s30, 1
      %p298 = por %p296, %p297
      %p299 = scmp.ne.s32.totalorder %s291, %s294
      %p300 = scmp.eq.s32.totalorder %s30, 0
      %p301 = por %p299, %p300
      %p302 = scmp.ne.s32.totalorder %s291, %s294
      %p303 = scmp.eq.s32.totalorder %s35, 1
      %p304 = por %p302, %p303
      %p305 = scmp.ne.s32.totalorder %s294, %s295
      %p306 = scmp.eq.s32.totalorder %s35, 0
      %p307 = por %p305, %p306
      %p308 = scmp.ne.s32.totalorder %s294, %s295
      %p309 = scmp.eq.s32.totalorder %s36, 1
      %p310 = por %p308, %p309
      %p312 = scmp.ne.s32.totalorder %s295, %s311
      %p313 = scmp.eq.s32.totalorder %s36, 0
      %p314 = por %p312, %p313
      %p315 = scmp.le.s32.totalorder 1, %s30
      %p316 = scmp.lt.s32.totalorder %s30, 3
      %p317 = pnand %p315, %p316
      %p318 = pneg %p317
      // Predicated region
      $region9: #{tpu_custom_call.1} parent=5 // pred_check
        _
      $region10: #{tpu_custom_call.1} parent=5 // pred_check_branch
        %320 = sbr.rel (%p317) target = $region12
      $region11: #{tpu_custom_call.1} parent=5 // pred_region
        %s321 = ssub.s32 %s30, 1
        // Predicated region
        $region13: #{tpu_custom_call.1} parent=11 // pred_check
          %p322 = pneg %p77
        $region14: #{tpu_custom_call.1} parent=11 // pred_check_branch
          %324 = sbr.rel (%p322) target = $region16
        $region15: #{tpu_custom_call.1} parent=11 // pred_region
          _
        $region16: #{tpu_custom_call.1} parent=11 // pred_fallthru
          _
        // Predicated region
        $region17: #{tpu_custom_call.1} parent=11 // pred_check
          %p325 = pneg %p98
        $region18: #{tpu_custom_call.1} parent=11 // pred_check_branch
          %327 = sbr.rel (%p325) target = $region20
        $region19: #{tpu_custom_call.1} parent=11 // pred_region
          _
        $region20: #{tpu_custom_call.1} parent=11 // pred_fallthru
          _
        // Predicated region
        $region21: #{tpu_custom_call.1} parent=11 // pred_check
          %p328 = pneg %p119
        $region22: #{tpu_custom_call.1} parent=11 // pred_check_branch
          %330 = sbr.rel (%p328) target = $region24
        $region23: #{tpu_custom_call.1} parent=11 // pred_region
          _
        $region24: #{tpu_custom_call.1} parent=11 // pred_fallthru
          _
        // Predicated region
        $region25: #{tpu_custom_call.1} parent=11 // pred_check
          %p331 = pneg %p140
        $region26: #{tpu_custom_call.1} parent=11 // pred_check_branch
          %333 = sbr.rel (%p331) target = $region28
        $region27: #{tpu_custom_call.1} parent=11 // pred_region
          _
        $region28: #{tpu_custom_call.1} parent=11 // pred_fallthru
          _
        // Predicated region
        $region29: #{tpu_custom_call.1} parent=11 // pred_check
          %p334 = pneg %p161
        $region30: #{tpu_custom_call.1} parent=11 // pred_check_branch
          %336 = sbr.rel (%p334) target = $region32
        $region31: #{tpu_custom_call.1} parent=11 // pred_region
          _
        $region32: #{tpu_custom_call.1} parent=11 // pred_fallthru
          _
        // Predicated region
        $region33: #{tpu_custom_call.1} parent=11 // pred_check
          %p337 = pneg %p182
        $region34: #{tpu_custom_call.1} parent=11 // pred_check_branch
          %339 = sbr.rel (%p337) target = $region36
        $region35: #{tpu_custom_call.1} parent=11 // pred_region
          _
        $region36: #{tpu_custom_call.1} parent=11 // pred_fallthru
          _
        // Predicated region
        $region37: #{tpu_custom_call.1} parent=11 // pred_check
          %p340 = pneg %p203
        $region38: #{tpu_custom_call.1} parent=11 // pred_check_branch
          %342 = sbr.rel (%p340) target = $region40
        $region39: #{tpu_custom_call.1} parent=11 // pred_region
          _
        $region40: #{tpu_custom_call.1} parent=11 // pred_fallthru
          _
      $region12: #{tpu_custom_call.1} parent=5 // pred_fallthru
        _
      %p343 = scmp.lt.s32.totalorder %s30, 2
      // Predicated region
      $region41: #{tpu_custom_call.1} parent=5 // pred_check
        %p344 = pneg %p343
      $region42: #{tpu_custom_call.1} parent=5 // pred_check_branch
        %346 = sbr.rel (%p344) target = $region44
      $region43: #{tpu_custom_call.1} parent=5 // pred_region
        // Predicated region
        $region45: #{tpu_custom_call.1} parent=43 // pred_check
          %p347 = pneg %p50
        $region46: #{tpu_custom_call.1} parent=43 // pred_check_branch
          %349 = sbr.rel (%p347) target = $region48
        $region47: #{tpu_custom_call.1} parent=43 // pred_region
          %s350 = sand.u32 %s40, 1
          %s351 = scalar_lea.sflag [#allocation3], %s350
          %s352 = sand.u32 %s40, 1
          %s353 = smul.addr %s352, 128
          %s354 = scalar_lea.vmem [#allocation2], %s353
          %s356 = ssub.s32 2048, 2048
          %357 = vsyncadd %s351, %s356
          %s358 = smul.addr %s30, 16
          %s359 = smul.addr %s358, 128
          %s360 = scalar_lea.hbm %s0, %s359
          %s361 = sshll.u32 %s354, 4
          %s362 = int_to_ptr.vmem [resolvable:$true] %s361
          %367 = dma.hbm_to_vmem [thread:$0]  %s360, 2048, %s362, %s351, 256, 256, 16
        $region48: #{tpu_custom_call.1} parent=43 // pred_fallthru
          _
      $region44: #{tpu_custom_call.1} parent=5 // pred_fallthru
        _
      %p368 = scmp.le.s32.totalorder 1, %s30
      %p369 = scmp.lt.s32.totalorder %s30, 3
      %p370 = pnand %p368, %p369
      %p371 = pneg %p370
      // Predicated region
      $region49: #{tpu_custom_call.1} parent=5 // pred_check
        _
      $region50: #{tpu_custom_call.1} parent=5 // pred_check_branch
        %373 = sbr.rel (%p370) target = $region52
      $region51: #{tpu_custom_call.1} parent=5 // pred_region
        %s374 = ssub.s32 %s30, 1
        %s375 = sand.u32 %s43, 1
        %s376 = scalar_lea.sflag [#allocation3], %s375
        %s377 = sand.u32 %s43, 1
        %s378 = smul.addr %s377, 128
        %s379 = scalar_lea.vmem [#allocation2], %s378
        // Predicated region
        $region53: #{tpu_custom_call.1} parent=51 // pred_check
          %p380 = pneg %p56
        $region54: #{tpu_custom_call.1} parent=51 // pred_check_branch
          %382 = sbr.rel (%p380) target = $region56
        $region55: #{tpu_custom_call.1} parent=51 // pred_region
          %383 = dma.done %s376, 2048
        $region56: #{tpu_custom_call.1} parent=51 // pred_fallthru
          _
        %s384 = sand.u32 %s43, 1
        %s385 = scalar_lea.sflag [#allocation3], %s384
        %s386 = sand.u32 %s43, 1
        %s387 = smul.addr %s386, 128
        %s388 = scalar_lea.vmem [#allocation2], %s387
        %p389 = pneg %p56
        %p390 = pneg %p53
        %p391 = pneg %p77
        %p392 = pneg %p74
        %p393 = pneg %p98
        %p394 = pneg %p95
        %p395 = pneg %p119
        %p396 = pneg %p116
        %p397 = pneg %p140
        %p398 = pneg %p137
        %p399 = pneg %p161
        %p400 = pneg %p158
        %p401 = pneg %p182
        %p402 = pneg %p179
        %p403 = pneg %p203
        %p404 = pneg %p200
        %p405 = pneg %p229
        %p406 = pneg %p226
        %s407 = sand.u32 %s216, 1
        %s408 = scalar_lea.sflag [#allocation4], %s407
        %s409 = sand.u32 %s216, 1
        %s410 = smul.addr %s409, 64
        %s411 = scalar_lea.vmem [#allocation5], %s410
        %p412 = pneg %p255
        %p413 = pneg %p252
        %s414 = sand.u32 %s35, 1
        %s415 = scalar_lea.sflag [#allocation7], %s414
        %s416 = sand.u32 %s242, 1
        %s417 = smul.addr %s416, 64
        %s418 = scalar_lea.vmem [#allocation6], %s417
        %p419 = pneg %p281
        %p420 = pneg %p278
        %s421 = sand.u32 %s35, 1
        %s422 = scalar_lea.sflag [#allocation7], %s421
        %s423 = sand.u32 %s268, 1
        %s424 = smul.addr %s423, 64
        %s425 = scalar_lea.vmem [#allocation8], %s424
        %p426 = pneg %p307
        %p427 = pneg %p304
        %s428 = sand.u32 %s294, 1
        %s429 = scalar_lea.sflag [#allocation10], %s428
        %s430 = sand.u32 %s294, 1
        %s431 = smul.addr %s430, 80
        %s432 = scalar_lea.vmem [#allocation9], %s431
        %v435 = vld [vmem:[%s379] sm:$0xff]
        %v436 = vld [vmem:[%s379 + $0x8] sm:$0xff]
        %v437 = vld [vmem:[%s379 + $0x10] sm:$0xff]
        %v438 = vld [vmem:[%s379 + $0x18] sm:$0xff]
        %v439 = vld [vmem:[%s379 + $0x20] sm:$0xff]
        %v440 = vld [vmem:[%s379 + $0x28] sm:$0xff]
        %v441 = vld [vmem:[%s379 + $0x30] sm:$0xff]
        %v442 = vld [vmem:[%s379 + $0x38] sm:$0xff]
        %v443 = vld [vmem:[%s379 + $0x40] sm:$0xff]
        %v444 = vld [vmem:[%s379 + $0x48] sm:$0xff]
        %v445 = vld [vmem:[%s379 + $0x50] sm:$0xff]
        %v446 = vld [vmem:[%s379 + $0x58] sm:$0xff]
        %v447 = vld [vmem:[%s379 + $0x60] sm:$0xff]
        %v448 = vld [vmem:[%s379 + $0x68] sm:$0xff]
        %v449 = vld [vmem:[%s379 + $0x70] sm:$0xff]
        %v450 = vld [vmem:[%s379 + $0x78] sm:$0xff]
        %v451 = vadd.f32 %v435, %v436
        %452 = vadd.xlane.f32.xlu0 %v451
        %v453 = vpop.xlane.xlu0 %452
        %v454 = vadd.f32 %v437, %v438
        %455 = vadd.xlane.f32.xlu0 %v454
        %v456 = vpop.xlane.xlu0 %455
        %v457 = vadd.f32 %v439, %v440
        %458 = vadd.xlane.f32.xlu0 %v457
        %v459 = vpop.xlane.xlu0 %458
        %v460 = vadd.f32 %v441, %v442
        %461 = vadd.xlane.f32.xlu0 %v460
        %v462 = vpop.xlane.xlu0 %461
        %v463 = vadd.f32 %v443, %v444
        %464 = vadd.xlane.f32.xlu0 %v463
        %v465 = vpop.xlane.xlu0 %464
        %v466 = vadd.f32 %v445, %v446
        %467 = vadd.xlane.f32.xlu0 %v466
        %v468 = vpop.xlane.xlu0 %467
        %v469 = vadd.f32 %v447, %v448
        %470 = vadd.xlane.f32.xlu0 %v469
        %v471 = vpop.xlane.xlu0 %470
        %v472 = vadd.f32 %v449, %v450
        %473 = vadd.xlane.f32.xlu0 %v472
        %v474 = vpop.xlane.xlu0 %473
        %v475 = vmul.f32 %v435, %v435
        %v476 = vmul.f32 %v436, %v436
        %v477 = vmul.f32 %v437, %v437
        %v478 = vmul.f32 %v438, %v438
        %v479 = vmul.f32 %v439, %v439
        %v480 = vmul.f32 %v440, %v440
        %v481 = vmul.f32 %v441, %v441
        %v482 = vmul.f32 %v442, %v442
        %v483 = vmul.f32 %v443, %v443
        %v484 = vmul.f32 %v444, %v444
        %v485 = vmul.f32 %v445, %v445
        %v486 = vmul.f32 %v446, %v446
        %v487 = vmul.f32 %v447, %v447
        %v488 = vmul.f32 %v448, %v448
        %v489 = vmul.f32 %v449, %v449
        %v490 = vmul.f32 %v450, %v450
        %v491 = vadd.f32 %v475, %v476
        %492 = vadd.xlane.f32.xlu0 %v491
        %v493 = vpop.xlane.xlu0 %492
        %v494 = vadd.f32 %v477, %v478
        %495 = vadd.xlane.f32.xlu0 %v494
        %v496 = vpop.xlane.xlu0 %495
        %v497 = vadd.f32 %v479, %v480
        %498 = vadd.xlane.f32.xlu0 %v497
        %v499 = vpop.xlane.xlu0 %498
        %v500 = vadd.f32 %v481, %v482
        %501 = vadd.xlane.f32.xlu0 %v500
        %v502 = vpop.xlane.xlu0 %501
        %v503 = vadd.f32 %v483, %v484
        %504 = vadd.xlane.f32.xlu0 %v503
        %v505 = vpop.xlane.xlu0 %504
        %v506 = vadd.f32 %v485, %v486
        %507 = vadd.xlane.f32.xlu0 %v506
        %v508 = vpop.xlane.xlu0 %507
        %v509 = vadd.f32 %v487, %v488
        %510 = vadd.xlane.f32.xlu0 %v509
        %v511 = vpop.xlane.xlu0 %510
        %v512 = vadd.f32 %v489, %v490
        %513 = vadd.xlane.f32.xlu0 %v512
        %v514 = vpop.xlane.xlu0 %513
        %vm515 = vcmask 7168
        %v516 = vsel %vm515, %v453, %v493
        %v517 = vsel %vm515, %v456, %v496
        %v518 = vsel %vm515, %v459, %v499
        %v519 = vsel %vm515, %v462, %v502
        %v520 = vsel %vm515, %v465, %v505
        %v521 = vsel %vm515, %v468, %v508
        %v522 = vsel %vm515, %v471, %v511
        %v523 = vsel %vm515, %v474, %v514
        %v524 = vld [vmem:[%s3] sm:$0xff]
        %v525 = vld [vmem:[%s3 + $0x8] sm:$0xff]
        %v526 = vld [vmem:[%s3 + $0x10] sm:$0xff]
        %v527 = vld [vmem:[%s3 + $0x18] sm:$0xff]
        %vm528 = vcmask 523264
        %v530 = vsel %vm528, %v524, 0
        %v533 = vsel %vm528, %v525, 0
        %v536 = vsel %vm528, %v526, 0
        %v539 = vsel %vm528, %v527, 0
        %541 = vmatprep.subr.mxu0 0.0
        %542 = vmatpush1.msra.mxu0 %v516
        %543 = vmatprep.subr.mxu0 0.0
        %544 = vmatpush1.msra.mxu0 %v517
        %545 = vmatprep.subr.mxu0 0.0
        %546 = vmatpush1.msra.mxu0 %v518
        %547 = vmatprep.subr.mxu0 0.0
        %548 = vmatpush1.msra.mxu0 %v519
        %549 = vmatprep.subr.mxu0 0.0
        %550 = vmatpush1.msra.mxu0 %v520
        %551 = vmatprep.subr.mxu0 0.0
        %552 = vmatpush1.msra.mxu0 %v521
        %553 = vmatprep.subr.mxu0 0.0
        %554 = vmatpush1.msra.mxu0 %v522
        %555 = vmatprep.subr.mxu0 0.0
        %556 = vmatpush1.msra.mxu0 %v523
        %557 = vmatprep.subr.mxu0 0.0
        %558 = vmatpush1.msra.mxu0 0.0
        %559 = vmatprep.subr.mxu0 0.0
        %560 = vmatpush1.msra.mxu0 0.0
        %561 = vmatprep.subr.mxu0 0.0
        %562 = vmatpush1.msra.mxu0 0.0
        %563 = vmatprep.subr.mxu0 0.0
        %564 = vmatpush1.msra.mxu0 0.0
        %565 = vmatprep.subr.mxu0 0.0
        %566 = vmatpush1.msra.mxu0 0.0
        %567 = vmatprep.subr.mxu0 0.0
        %568 = vmatpush1.msra.mxu0 0.0
        %569 = vmatprep.subr.mxu0 0.0
        %570 = vmatpush1.msra.mxu0 0.0
        %571 = vmatprep.subr.mxu0 0.0
        %572 = vmatpush1.msra.mxu0 0.0
        %573 = vmatprep.subr.mxu0 0.0
        %574 = vmatpush1.msra.mxu0 0.0
        %575 = vmatprep.subr.mxu0 0.0
        %576 = vmatpush1.msra.mxu0 0.0
        %577 = vmatprep.subr.mxu0 0.0
        %578 = vmatpush1.msra.mxu0 0.0
        %579 = vmatprep.subr.mxu0 0.0
        %580 = vmatpush1.msra.mxu0 0.0
        %581 = vmatprep.subr.mxu0 0.0
        %582 = vmatpush1.msra.mxu0 0.0
        %583 = vmatprep.subr.mxu0 0.0
        %584 = vmatpush1.msra.mxu0 0.0
        %585 = vmatprep.subr.mxu0 0.0
        %586 = vmatpush1.msra.mxu0 0.0
        %587 = vmatprep.subr.mxu0 0.0
        %588 = vmatpush1.msra.mxu0 0.0
        %589 = vmatprep.subr.mxu0 0.0
        %590 = vmatpush1.msra.mxu0 0.0
        %591 = vmatprep.subr.mxu0 0.0
        %592 = vmatpush1.msra.mxu0 0.0
        %593 = vmatprep.subr.mxu0 0.0
        %594 = vmatpush1.msra.mxu0 0.0
        %595 = vmatprep.subr.mxu0 0.0
        %596 = vmatpush1.msra.mxu0 0.0
        %597 = vmatprep.subr.mxu0 0.0
        %598 = vmatpush1.msra.mxu0 0.0
        %599 = vmatprep.subr.mxu0 0.0
        %600 = vmatpush1.msra.mxu0 0.0
        %601 = vmatprep.subr.mxu0 0.0
        %602 = vmatpush1.msra.mxu0 0.0
        %603 = vmatprep.subr.mxu0 0.0
        %604 = vmatpush1.msra.mxu0 0.0
        %605 = vmatprep.mubr.f32.mxu0 0.0
        %606 = vmatmul.mubr.f32.gmra.mrb[0].mxu0 %v530
        %v607 = vpop.f32.mrb[0].mxu0
        %v608 = vadd.f32 0.0, %v607
        %v609 = vpop.f32.mrb[0].mxu0
        %610 = vmatprep.mubr.f32.mxu0 0.0
        %611 = vmatmul.mubr.f32.gmra.mrb[0].mxu0 %v533
        %v612 = vpop.f32.mrb[0].mxu0
        %v613 = vadd.f32 0.0, %v612
        %v614 = vpop.f32.mrb[0].mxu0
        %615 = vmatprep.mubr.f32.mxu0 0.0
        %616 = vmatmul.mubr.f32.gmra.mrb[0].mxu0 %v536
        %v617 = vpop.f32.mrb[0].mxu0
        %v618 = vadd.f32 0.0, %v617
        %v619 = vpop.f32.mrb[0].mxu0
        %620 = vmatprep.mubr.f32.mxu0 0.0
        %621 = vmatmul.mubr.f32.gmra.mrb[0].mxu0 %v539
        %v622 = vpop.f32.mrb[0].mxu0
        %v623 = vadd.f32 0.0, %v622
        %v624 = vpop.f32.mrb[0].mxu0
        %625 = vdwg.mxu0
        %v626 = vmul.f32 %v608, 0.001953125
        %v627 = vmul.f32 %v613, 0.001953125
        %v628 = vmul.f32 %v618, 0.001953125
        %v629 = vmul.f32 %v623, 0.001953125
        %v630 = vmul.f32 %v626, %v626
        %v631 = vmul.f32 %v627, %v627
        %v632 = vmul.f32 %v628, %v628
        %v633 = vmul.f32 %v629, %v629
        %638 = vrot.lane.b32.xlu0 %v630, 1
        %v639 = vpop.permute.xlu0 %638
        %640 = vrot.lane.b32.xlu0 %v631, 1
        %v641 = vpop.permute.xlu0 %640
        %642 = vrot.lane.b32.xlu0 %v632, 1
        %v643 = vpop.permute.xlu0 %642
        %644 = vrot.lane.b32.xlu0 %v633, 1
        %v645 = vpop.permute.xlu0 %644
        %v650 = vsub.f32 %v626, %v639
        %v651 = vsub.f32 %v627, %v641
        %v652 = vsub.f32 %v628, %v643
        %v653 = vsub.f32 %v629, %v645
        %v654 = vadd.f32 %v650, 1e-05
        %v655 = vadd.f32 %v651, 1e-05
        %v656 = vadd.f32 %v652, 1e-05
        %v657 = vadd.f32 %v653, 1e-05
        %v658 = vrsqrt.pop %v654
        %v659 = vrsqrt.pop %v655
        %v660 = vrsqrt.pop %v656
        %v661 = vrsqrt.pop %v657
        %v662 = vsel %vm515, %v626, %v658
        %v663 = vsel %vm515, %v627, %v659
        %v664 = vsel %vm515, %v628, %v660
        %v665 = vsel %vm515, %v629, %v661
        %v666 = vld [vmem:[%s4] sm:$0xff]
        %v667 = vld [vmem:[%s4 + $0x8] sm:$0xff]
        %v668 = vld [vmem:[%s4 + $0x10] sm:$0xff]
        %v669 = vld [vmem:[%s4 + $0x18] sm:$0xff]
        %v670 = vld [vmem:[%s4 + $0x20] sm:$0xff]
        %v671 = vld [vmem:[%s4 + $0x28] sm:$0xff]
        %v672 = vld [vmem:[%s4 + $0x30] sm:$0xff]
        %v673 = vld [vmem:[%s4 + $0x38] sm:$0xff]
        %vm674 = vcmask 261120
        %v676 = vsel %vm674, %v666, 0
        %v679 = vsel %vm674, %v667, 0
        %v682 = vsel %vm674, %v668, 0
        %v685 = vsel %vm674, %v669, 0
        %v688 = vsel %vm674, %v670, 0
        %v691 = vsel %vm674, %v671, 0
        %v694 = vsel %vm674, %v672, 0
        %v697 = vsel %vm674, %v673, 0
        %699 = vmatprep.subr.mxu0 0.0
        %700 = vmatpush1.msra.mxu0 %v662
        %701 = vmatprep.subr.mxu0 0.0
        %702 = vmatpush1.msra.mxu0 %v663
        %703 = vmatprep.subr.mxu0 0.0
        %704 = vmatpush1.msra.mxu0 %v664
        %705 = vmatprep.subr.mxu0 0.0
        %706 = vmatpush1.msra.mxu0 %v665
        %707 = vmatprep.subr.mxu0 0.0
        %708 = vmatpush1.msra.mxu0 0.0
        %709 = vmatprep.subr.mxu0 0.0
        %710 = vmatpush1.msra.mxu0 0.0
        %711 = vmatprep.subr.mxu0 0.0
        %712 = vmatpush1.msra.mxu0 0.0
        %713 = vmatprep.subr.mxu0 0.0
        %714 = vmatpush1.msra.mxu0 0.0
        %715 = vmatprep.subr.mxu0 0.0
        %716 = vmatpush1.msra.mxu0 0.0
        %717 = vmatprep.subr.mxu0 0.0
        %718 = vmatpush1.msra.mxu0 0.0
        %719 = vmatprep.subr.mxu0 0.0
        %720 = vmatpush1.msra.mxu0 0.0
        %721 = vmatprep.subr.mxu0 0.0
        %722 = vmatpush1.msra.mxu0 0.0
        %723 = vmatprep.subr.mxu0 0.0
        %724 = vmatpush1.msra.mxu0 0.0
        %725 = vmatprep.subr.mxu0 0.0
        %726 = vmatpush1.msra.mxu0 0.0
        %727 = vmatprep.subr.mxu0 0.0
        %728 = vmatpush1.msra.mxu0 0.0
        %729 = vmatprep.subr.mxu0 0.0
        %730 = vmatpush1.msra.mxu0 0.0
        %731 = vmatprep.subr.mxu0 0.0
        %732 = vmatpush1.msra.mxu0 0.0
        %733 = vmatprep.subr.mxu0 0.0
        %734 = vmatpush1.msra.mxu0 0.0
        %735 = vmatprep.subr.mxu0 0.0
        %736 = vmatpush1.msra.mxu0 0.0
        %737 = vmatprep.subr.mxu0 0.0
        %738 = vmatpush1.msra.mxu0 0.0
        %739 = vmatprep.subr.mxu0 0.0
        %740 = vmatpush1.msra.mxu0 0.0
        %741 = vmatprep.subr.mxu0 0.0
        %742 = vmatpush1.msra.mxu0 0.0
        %743 = vmatprep.subr.mxu0 0.0
        %744 = vmatpush1.msra.mxu0 0.0
        %745 = vmatprep.subr.mxu0 0.0
        %746 = vmatpush1.msra.mxu0 0.0
        %747 = vmatprep.subr.mxu0 0.0
        %748 = vmatpush1.msra.mxu0 0.0
        %749 = vmatprep.subr.mxu0 0.0
        %750 = vmatpush1.msra.mxu0 0.0
        %751 = vmatprep.subr.mxu0 0.0
        %752 = vmatpush1.msra.mxu0 0.0
        %753 = vmatprep.subr.mxu0 0.0
        %754 = vmatpush1.msra.mxu0 0.0
        %755 = vmatprep.subr.mxu0 0.0
        %756 = vmatpush1.msra.mxu0 0.0
        %757 = vmatprep.subr.mxu0 0.0
        %758 = vmatpush1.msra.mxu0 0.0
        %759 = vmatprep.subr.mxu0 0.0
        %760 = vmatpush1.msra.mxu0 0.0
        %761 = vmatprep.subr.mxu0 0.0
        %762 = vmatpush1.msra.mxu0 0.0
        %763 = vmatprep.mubr.f32.mxu0 0.0
        %764 = vmatmul.mubr.f32.gmra.mrb[0].mxu0 %v676
        %v765 = vpop.f32.mrb[0].mxu0
        %v766 = vadd.f32 0.0, %v765
        %v767 = vpop.f32.mrb[0].mxu0
        %768 = vmatprep.mubr.f32.mxu0 0.0
        %769 = vmatmul.mubr.f32.gmra.mrb[0].mxu0 %v679
        %v770 = vpop.f32.mrb[0].mxu0
        %v771 = vadd.f32 0.0, %v770
        %v772 = vpop.f32.mrb[0].mxu0
        %773 = vmatprep.mubr.f32.mxu0 0.0
        %774 = vmatmul.mubr.f32.gmra.mrb[0].mxu0 %v682
        %v775 = vpop.f32.mrb[0].mxu0
        %v776 = vadd.f32 0.0, %v775
        %v777 = vpop.f32.mrb[0].mxu0
        %778 = vmatprep.mubr.f32.mxu0 0.0
        %779 = vmatmul.mubr.f32.gmra.mrb[0].mxu0 %v685
        %v780 = vpop.f32.mrb[0].mxu0
        %v781 = vadd.f32 0.0, %v780
        %v782 = vpop.f32.mrb[0].mxu0
        %783 = vmatprep.mubr.f32.mxu0 0.0
        %784 = vmatmul.mubr.f32.gmra.mrb[0].mxu0 %v688
        %v785 = vpop.f32.mrb[0].mxu0
        %v786 = vadd.f32 0.0, %v785
        %v787 = vpop.f32.mrb[0].mxu0
        %788 = vmatprep.mubr.f32.mxu0 0.0
        %789 = vmatmul.mubr.f32.gmra.mrb[0].mxu0 %v691
        %v790 = vpop.f32.mrb[0].mxu0
        %v791 = vadd.f32 0.0, %v790
        %v792 = vpop.f32.mrb[0].mxu0
        %793 = vmatprep.mubr.f32.mxu0 0.0
        %794 = vmatmul.mubr.f32.gmra.mrb[0].mxu0 %v694
        %v795 = vpop.f32.mrb[0].mxu0
        %v796 = vadd.f32 0.0, %v795
        %v797 = vpop.f32.mrb[0].mxu0
        %798 = vmatprep.mubr.f32.mxu0 0.0
        %799 = vmatmul.mubr.f32.gmra.mrb[0].mxu0 %v697
        %v800 = vpop.f32.mrb[0].mxu0
        %v801 = vadd.f32 0.0, %v800
        %v802 = vpop.f32.mrb[0].mxu0
        %803 = vdwg.mxu0
        %v804 = vld [vmem:[%s1] sm:$0xff]
        %v805 = vld [vmem:[%s1 + $0x8] sm:$0xff]
        %v806 = vld [vmem:[%s1 + $0x10] sm:$0xff]
        %v807 = vld [vmem:[%s1 + $0x18] sm:$0xff]
        %v808 = vld [vmem:[%s1 + $0x20] sm:$0xff]
        %v809 = vld [vmem:[%s1 + $0x28] sm:$0xff]
        %v810 = vld [vmem:[%s1 + $0x30] sm:$0xff]
        %v811 = vld [vmem:[%s1 + $0x38] sm:$0xff]
        %820 = vrot.lane.b32.xlu0 %v766, 127
        %v821 = vpop.permute.xlu0 %820
        %822 = vrot.lane.b32.xlu0 %v771, 127
        %v823 = vpop.permute.xlu0 %822
        %824 = vrot.lane.b32.xlu0 %v776, 127
        %v825 = vpop.permute.xlu0 %824
        %826 = vrot.lane.b32.xlu0 %v781, 127
        %v827 = vpop.permute.xlu0 %826
        %828 = vrot.lane.b32.xlu0 %v786, 127
        %v829 = vpop.permute.xlu0 %828
        %830 = vrot.lane.b32.xlu0 %v791, 127
        %v831 = vpop.permute.xlu0 %830
        %832 = vrot.lane.b32.xlu0 %v796, 127
        %v833 = vpop.permute.xlu0 %832
        %834 = vrot.lane.b32.xlu0 %v801, 127
        %v835 = vpop.permute.xlu0 %834
        %v844 = vmul.f32 %v804, %v821
        %v845 = vmul.f32 %v805, %v823
        %v846 = vmul.f32 %v806, %v825
        %v847 = vmul.f32 %v807, %v827
        %v848 = vmul.f32 %v808, %v829
        %v849 = vmul.f32 %v809, %v831
        %v850 = vmul.f32 %v810, %v833
        %v851 = vmul.f32 %v811, %v835
        %v852 = vld [vmem:[%s2] sm:$0xff]
        %v853 = vld [vmem:[%s2 + $0x8] sm:$0xff]
        %v854 = vld [vmem:[%s2 + $0x10] sm:$0xff]
        %v855 = vld [vmem:[%s2 + $0x18] sm:$0xff]
        %v856 = vld [vmem:[%s2 + $0x20] sm:$0xff]
        %v857 = vld [vmem:[%s2 + $0x28] sm:$0xff]
        %v858 = vld [vmem:[%s2 + $0x30] sm:$0xff]
        %v859 = vld [vmem:[%s2 + $0x38] sm:$0xff]
        %v860 = vmul.f32 %v766, %v844
        %v861 = vmul.f32 %v771, %v845
        %v862 = vmul.f32 %v776, %v846
        %v863 = vmul.f32 %v781, %v847
        %v864 = vmul.f32 %v786, %v848
        %v865 = vmul.f32 %v791, %v849
        %v866 = vmul.f32 %v796, %v850
        %v867 = vmul.f32 %v801, %v851
        %v868 = vsub.f32 %v852, %v860
        %v869 = vsub.f32 %v853, %v861
        %v870 = vsub.f32 %v854, %v862
        %v871 = vsub.f32 %v855, %v863
        %v872 = vsub.f32 %v856, %v864
        %v873 = vsub.f32 %v857, %v865
        %v874 = vsub.f32 %v858, %v866
        %v875 = vsub.f32 %v859, %v867
        %877 = vset.pattern.permute.xlu0 0
        %878 = vperm.xlu0 %877, %v844
        %v879 = vpop.permute.xlu0 %878
        %882 = vset.pattern.permute.xlu0 0
        %883 = vperm.xlu0 %882, %v845
        %v884 = vpop.permute.xlu0 %883
        %887 = vset.pattern.permute.xlu0 0
        %888 = vperm.xlu0 %887, %v846
        %v889 = vpop.permute.xlu0 %888
        %892 = vset.pattern.permute.xlu0 0
        %893 = vperm.xlu0 %892, %v847
        %v894 = vpop.permute.xlu0 %893
        %897 = vset.pattern.permute.xlu0 0
        %898 = vperm.xlu0 %897, %v848
        %v899 = vpop.permute.xlu0 %898
        %902 = vset.pattern.permute.xlu0 0
        %903 = vperm.xlu0 %902, %v849
        %v904 = vpop.permute.xlu0 %903
        %907 = vset.pattern.permute.xlu0 0
        %908 = vperm.xlu0 %907, %v850
        %v909 = vpop.permute.xlu0 %908
        %912 = vset.pattern.permute.xlu0 0
        %913 = vperm.xlu0 %912, %v851
        %v914 = vpop.permute.xlu0 %913
        %v916 = vmul.f32 %v435, %v879
        %v917 = vmul.f32 %v436, %v879
        %v918 = vmul.f32 %v437, %v884
        %v919 = vmul.f32 %v438, %v884
        %v920 = vmul.f32 %v439, %v889
        %v921 = vmul.f32 %v440, %v889
        %v922 = vmul.f32 %v441, %v894
        %v923 = vmul.f32 %v442, %v894
        %v924 = vmul.f32 %v443, %v899
        %v925 = vmul.f32 %v444, %v899
        %v926 = vmul.f32 %v445, %v904
        %v927 = vmul.f32 %v446, %v904
        %v928 = vmul.f32 %v447, %v909
        %v929 = vmul.f32 %v448, %v909
        %v930 = vmul.f32 %v449, %v914
        %v931 = vmul.f32 %v450, %v914
        %933 = vset.pattern.permute.xlu0 0
        %934 = vperm.xlu0 %933, %v868
        %v935 = vpop.permute.xlu0 %934
        %938 = vset.pattern.permute.xlu0 0
        %939 = vperm.xlu0 %938, %v869
        %v940 = vpop.permute.xlu0 %939
        %943 = vset.pattern.permute.xlu0 0
        %944 = vperm.xlu0 %943, %v870
        %v945 = vpop.permute.xlu0 %944
        %948 = vset.pattern.permute.xlu0 0
        %949 = vperm.xlu0 %948, %v871
        %v950 = vpop.permute.xlu0 %949
        %953 = vset.pattern.permute.xlu0 0
        %954 = vperm.xlu0 %953, %v872
        %v955 = vpop.permute.xlu0 %954
        %958 = vset.pattern.permute.xlu0 0
        %959 = vperm.xlu0 %958, %v873
        %v960 = vpop.permute.xlu0 %959
        %963 = vset.pattern.permute.xlu0 0
        %964 = vperm.xlu0 %963, %v874
        %v965 = vpop.permute.xlu0 %964
        %968 = vset.pattern.permute.xlu0 0
        %969 = vperm.xlu0 %968, %v875
        %v970 = vpop.permute.xlu0 %969
        %v972 = vadd.f32 %v916, %v935
        %v973 = vadd.f32 %v917, %v935
        %v974 = vadd.f32 %v918, %v940
        %v975 = vadd.f32 %v919, %v940
        %v976 = vadd.f32 %v920, %v945
        %v977 = vadd.f32 %v921, %v945
        %v978 = vadd.f32 %v922, %v950
        %v979 = vadd.f32 %v923, %v950
        %v980 = vadd.f32 %v924, %v955
        %v981 = vadd.f32 %v925, %v955
        %v982 = vadd.f32 %v926, %v960
        %v983 = vadd.f32 %v927, %v960
        %v984 = vadd.f32 %v928, %v965
        %v985 = vadd.f32 %v929, %v965
        %v986 = vadd.f32 %v930, %v970
        %v987 = vadd.f32 %v931, %v970
        %v988 = vpack.c.bf16 %v974, %v972
        %v989 = vpack.c.bf16 %v975, %v973
        %v990 = vpack.c.bf16 %v978, %v976
        %v991 = vpack.c.bf16 %v979, %v977
        %v992 = vpack.c.bf16 %v982, %v980
        %v993 = vpack.c.bf16 %v983, %v981
        %v994 = vpack.c.bf16 %v986, %v984
        %v995 = vpack.c.bf16 %v987, %v985
        %v1004 = vunpack.c.l.b16 %v988
        %v1005 = vunpack.c.l.b16 %v989
        %v1006 = vunpack.c.h.b16 %v988
        %v1007 = vunpack.c.h.b16 %v989
        %v1008 = vunpack.c.l.b16 %v990
        %v1009 = vunpack.c.l.b16 %v991
        %v1010 = vunpack.c.h.b16 %v990
        %v1011 = vunpack.c.h.b16 %v991
        %v1012 = vunpack.c.l.b16 %v992
        %v1013 = vunpack.c.l.b16 %v993
        %v1014 = vunpack.c.h.b16 %v992
        %v1015 = vunpack.c.h.b16 %v993
        %v1016 = vunpack.c.l.b16 %v994
        %v1017 = vunpack.c.l.b16 %v995
        %v1018 = vunpack.c.h.b16 %v994
        %v1019 = vunpack.c.h.b16 %v995
        %v1020 = vpack.c.b16 %v1005, %v1004
        %v1021 = vpack.c.b16 %v1007, %v1006
        %v1022 = vpack.c.b16 %v1009, %v1008
        %v1023 = vpack.c.b16 %v1011, %v1010
        %v1024 = vpack.c.b16 %v1013, %v1012
        %v1025 = vpack.c.b16 %v1015, %v1014
        %v1026 = vpack.c.b16 %v1017, %v1016
        %v1027 = vpack.c.b16 %v1019, %v1018
        %1036 = vst [vmem:[%s411] sm:$0xff] %v1020
        %1037 = vst [vmem:[%s411 + $0x8] sm:$0xff] %v1021
        %1038 = vst [vmem:[%s411 + $0x10] sm:$0xff] %v1022
        %1039 = vst [vmem:[%s411 + $0x18] sm:$0xff] %v1023
        %1040 = vst [vmem:[%s411 + $0x20] sm:$0xff] %v1024
        %1041 = vst [vmem:[%s411 + $0x28] sm:$0xff] %v1025
        %1042 = vst [vmem:[%s411 + $0x30] sm:$0xff] %v1026
        %1043 = vst [vmem:[%s411 + $0x38] sm:$0xff] %v1027
        %v1044 = vld [vmem:[%s5] sm:$0xf]
        %v1045 = vld [vmem:[%s5 + $0x4] sm:$0xf]
        %v1046 = vld [vmem:[%s5 + $0x8] sm:$0xf]
        %v1047 = vld [vmem:[%s5 + $0xc] sm:$0xf]
        %v1048 = vld [vmem:[%s5 + $0x10] sm:$0xf]
        %v1049 = vld [vmem:[%s5 + $0x14] sm:$0xf]
        %v1050 = vld [vmem:[%s5 + $0x18] sm:$0xf]
        %v1051 = vld [vmem:[%s5 + $0x1c] sm:$0xf]
        %v1060 = vunpack.c.l.b16 %v1044
        %v1061 = vunpack.c.l.b16 %v1045
        %v1062 = vunpack.c.l.b16 %v1046
        %v1063 = vunpack.c.l.b16 %v1047
        %v1064 = vunpack.c.l.b16 %v1048
        %v1065 = vunpack.c.l.b16 %v1049
        %v1066 = vunpack.c.l.b16 %v1050
        %v1067 = vunpack.c.l.b16 %v1051
        %v1068 = vpack.c.b16 %v1061, %v1060
        %v1069 = vpack.c.b16 %v1063, %v1062
        %v1070 = vpack.c.b16 %v1065, %v1064
        %v1071 = vpack.c.b16 %v1067, %v1066
        %v1073 = vsel %vm528, %v1068, 0
        %v1076 = vsel %vm528, %v1069, 0
        %v1079 = vsel %vm528, %v1070, 0
        %v1082 = vsel %vm528, %v1071, 0
        %1084 = vmatprep.subr.bf16.mxu0 %v989
        %1085 = vmatpush1.bf16.msra.mxu0 %v988
        %1086 = vmatprep.subr.bf16.mxu0 %v991
        %1087 = vmatpush1.bf16.msra.mxu0 %v990
        %1088 = vmatprep.subr.bf16.mxu0 %v993
        %1089 = vmatpush1.bf16.msra.mxu0 %v992
        %1090 = vmatprep.subr.bf16.mxu0 %v995
        %1091 = vmatpush1.bf16.msra.mxu0 %v994
        %1092 = vmatprep.subr.bf16.mxu0 0
        %1093 = vmatpush1.bf16.msra.mxu0 0
        %1094 = vmatprep.subr.bf16.mxu0 0
        %1095 = vmatpush1.bf16.msra.mxu0 0
        %1096 = vmatprep.subr.bf16.mxu0 0
        %1097 = vmatpush1.bf16.msra.mxu0 0
        %1098 = vmatprep.subr.bf16.mxu0 0
        %1099 = vmatpush1.bf16.msra.mxu0 0
        %1100 = vmatprep.subr.bf16.mxu0 0
        %1101 = vmatpush1.bf16.msra.mxu0 0
        %1102 = vmatprep.subr.bf16.mxu0 0
        %1103 = vmatpush1.bf16.msra.mxu0 0
        %1104 = vmatprep.subr.bf16.mxu0 0
        %1105 = vmatpush1.bf16.msra.mxu0 0
        %1106 = vmatprep.subr.bf16.mxu0 0
        %1107 = vmatpush1.bf16.msra.mxu0 0
        %1108 = vmatprep.subr.bf16.mxu0 0
        %1109 = vmatpush1.bf16.msra.mxu0 0
        %1110 = vmatprep.subr.bf16.mxu0 0
        %1111 = vmatpush1.bf16.msra.mxu0 0
        %1112 = vmatprep.subr.bf16.mxu0 0
        %1113 = vmatpush1.bf16.msra.mxu0 0
        %1114 = vmatprep.subr.bf16.mxu0 0
        %1115 = vmatpush1.bf16.msra.mxu0 0
        %1116 = vmatprep.mubr.bf16.mxu0 0
        %1117 = vmatmul.mubr.bf16.gmra.mrb[0].mxu0 %v1073
        %v1118 = vpop.f32.mrb[0].mxu0
        %v1119 = vadd.f32 0.0, %v1118
        %v1120 = vpop.f32.mrb[0].mxu0
        %v1121 = vadd.f32 0.0, %v1120
        %v1122 = vpop.f32.mrb[0].mxu0
        %v1123 = vadd.f32 0.0, %v1122
        %v1124 = vpop.f32.mrb[0].mxu0
        %v1125 = vadd.f32 0.0, %v1124
        %1126 = vmatprep.mubr.bf16.mxu0 0
        %1127 = vmatmul.mubr.bf16.gmra.mrb[0].mxu0 %v1076
        %v1128 = vpop.f32.mrb[0].mxu0
        %v1129 = vadd.f32 0.0, %v1128
        %v1130 = vpop.f32.mrb[0].mxu0
        %v1131 = vadd.f32 0.0, %v1130
        %v1132 = vpop.f32.mrb[0].mxu0
        %v1133 = vadd.f32 0.0, %v1132
        %v1134 = vpop.f32.mrb[0].mxu0
        %v1135 = vadd.f32 0.0, %v1134
        %1136 = vmatprep.mubr.bf16.mxu0 0
        %1137 = vmatmul.mubr.bf16.gmra.mrb[0].mxu0 %v1079
        %v1138 = vpop.f32.mrb[0].mxu0
        %v1139 = vadd.f32 0.0, %v1138
        %v1140 = vpop.f32.mrb[0].mxu0
        %v1141 = vadd.f32 0.0, %v1140
        %v1142 = vpop.f32.mrb[0].mxu0
        %v1143 = vadd.f32 0.0, %v1142
        %v1144 = vpop.f32.mrb[0].mxu0
        %v1145 = vadd.f32 0.0, %v1144
        %1146 = vmatprep.mubr.bf16.mxu0 0
        %1147 = vmatmul.mubr.bf16.gmra.mrb[0].mxu0 %v1082
        %v1148 = vpop.f32.mrb[0].mxu0
        %v1149 = vadd.f32 0.0, %v1148
        %v1150 = vpop.f32.mrb[0].mxu0
        %v1151 = vadd.f32 0.0, %v1150
        %v1152 = vpop.f32.mrb[0].mxu0
        %v1153 = vadd.f32 0.0, %v1152
        %v1154 = vpop.f32.mrb[0].mxu0
        %v1155 = vadd.f32 0.0, %v1154
        %1156 = vdwg.mxu0
        %v1157 = vpack.c.bf16 %v1123, %v1119
        %v1158 = vpack.c.bf16 %v1125, %v1121
        %v1159 = vpack.c.bf16 %v1133, %v1129
        %v1160 = vpack.c.bf16 %v1135, %v1131
        %v1161 = vpack.c.bf16 %v1143, %v1139
        %v1162 = vpack.c.bf16 %v1145, %v1141
        %v1163 = vpack.c.bf16 %v1153, %v1149
        %v1164 = vpack.c.bf16 %v1155, %v1151
        %v1173 = vunpack.c.l.b16 %v1157
        %v1174 = vunpack.c.l.b16 %v1158
        %v1175 = vunpack.c.h.b16 %v1157
        %v1176 = vunpack.c.h.b16 %v1158
        %v1177 = vunpack.c.l.b16 %v1159
        %v1178 = vunpack.c.l.b16 %v1160
        %v1179 = vunpack.c.h.b16 %v1159
        %v1180 = vunpack.c.h.b16 %v1160
        %v1181 = vunpack.c.l.b16 %v1161
        %v1182 = vunpack.c.l.b16 %v1162
        %v1183 = vunpack.c.h.b16 %v1161
        %v1184 = vunpack.c.h.b16 %v1162
        %v1185 = vunpack.c.l.b16 %v1163
        %v1186 = vunpack.c.l.b16 %v1164
        %v1187 = vunpack.c.h.b16 %v1163
        %v1188 = vunpack.c.h.b16 %v1164
        %v1189 = vpack.c.b16 %v1174, %v1173
        %v1190 = vpack.c.b16 %v1176, %v1175
        %v1191 = vpack.c.b16 %v1178, %v1177
        %v1192 = vpack.c.b16 %v1180, %v1179
        %v1193 = vpack.c.b16 %v1182, %v1181
        %v1194 = vpack.c.b16 %v1184, %v1183
        %v1195 = vpack.c.b16 %v1186, %v1185
        %v1196 = vpack.c.b16 %v1188, %v1187
        %1205 = vst [vmem:[%s418] sm:$0xff] %v1189
        %1206 = vst [vmem:[%s418 + $0x8] sm:$0xff] %v1190
        %1207 = vst [vmem:[%s418 + $0x10] sm:$0xff] %v1191
        %1208 = vst [vmem:[%s418 + $0x18] sm:$0xff] %v1192
        %1209 = vst [vmem:[%s418 + $0x20] sm:$0xff] %v1193
        %1210 = vst [vmem:[%s418 + $0x28] sm:$0xff] %v1194
        %1211 = vst [vmem:[%s418 + $0x30] sm:$0xff] %v1195
        %1212 = vst [vmem:[%s418 + $0x38] sm:$0xff] %v1196
        %v1213 = vld [vmem:[%s6] sm:$0xf]
        %v1214 = vld [vmem:[%s6 + $0x4] sm:$0xf]
        %v1215 = vld [vmem:[%s6 + $0x8] sm:$0xf]
        %v1216 = vld [vmem:[%s6 + $0xc] sm:$0xf]
        %v1217 = vld [vmem:[%s6 + $0x10] sm:$0xf]
        %v1218 = vld [vmem:[%s6 + $0x14] sm:$0xf]
        %v1219 = vld [vmem:[%s6 + $0x18] sm:$0xf]
        %v1220 = vld [vmem:[%s6 + $0x1c] sm:$0xf]
        %v1229 = vunpack.c.l.b16 %v1213
        %v1230 = vunpack.c.l.b16 %v1214
        %v1231 = vunpack.c.l.b16 %v1215
        %v1232 = vunpack.c.l.b16 %v1216
        %v1233 = vunpack.c.l.b16 %v1217
        %v1234 = vunpack.c.l.b16 %v1218
        %v1235 = vunpack.c.l.b16 %v1219
        %v1236 = vunpack.c.l.b16 %v1220
        %v1237 = vpack.c.b16 %v1230, %v1229
        %v1238 = vpack.c.b16 %v1232, %v1231
        %v1239 = vpack.c.b16 %v1234, %v1233
        %v1240 = vpack.c.b16 %v1236, %v1235
        %v1242 = vsel %vm528, %v1237, 0
        %v1245 = vsel %vm528, %v1238, 0
        %v1248 = vsel %vm528, %v1239, 0
        %v1251 = vsel %vm528, %v1240, 0
        %1253 = vmatprep.subr.bf16.mxu0 %v989
        %1254 = vmatpush1.bf16.msra.mxu0 %v988
        %1255 = vmatprep.subr.bf16.mxu0 %v991
        %1256 = vmatpush1.bf16.msra.mxu0 %v990
        %1257 = vmatprep.subr.bf16.mxu0 %v993
        %1258 = vmatpush1.bf16.msra.mxu0 %v992
        %1259 = vmatprep.subr.bf16.mxu0 %v995
        %1260 = vmatpush1.bf16.msra.mxu0 %v994
        %1261 = vmatprep.subr.bf16.mxu0 0
        %1262 = vmatpush1.bf16.msra.mxu0 0
        %1263 = vmatprep.subr.bf16.mxu0 0
        %1264 = vmatpush1.bf16.msra.mxu0 0
        %1265 = vmatprep.subr.bf16.mxu0 0
        %1266 = vmatpush1.bf16.msra.mxu0 0
        %1267 = vmatprep.subr.bf16.mxu0 0
        %1268 = vmatpush1.bf16.msra.mxu0 0
        %1269 = vmatprep.subr.bf16.mxu0 0
        %1270 = vmatpush1.bf16.msra.mxu0 0
        %1271 = vmatprep.subr.bf16.mxu0 0
        %1272 = vmatpush1.bf16.msra.mxu0 0
        %1273 = vmatprep.subr.bf16.mxu0 0
        %1274 = vmatpush1.bf16.msra.mxu0 0
        %1275 = vmatprep.subr.bf16.mxu0 0
        %1276 = vmatpush1.bf16.msra.mxu0 0
        %1277 = vmatprep.subr.bf16.mxu0 0
        %1278 = vmatpush1.bf16.msra.mxu0 0
        %1279 = vmatprep.subr.bf16.mxu0 0
        %1280 = vmatpush1.bf16.msra.mxu0 0
        %1281 = vmatprep.subr.bf16.mxu0 0
        %1282 = vmatpush1.bf16.msra.mxu0 0
        %1283 = vmatprep.subr.bf16.mxu0 0
        %1284 = vmatpush1.bf16.msra.mxu0 0
        %1285 = vmatprep.mubr.bf16.mxu0 0
        %1286 = vmatmul.mubr.bf16.gmra.mrb[0].mxu0 %v1242
        %v1287 = vpop.f32.mrb[0].mxu0
        %v1288 = vadd.f32 0.0, %v1287
        %v1289 = vpop.f32.mrb[0].mxu0
        %v1290 = vadd.f32 0.0, %v1289
        %v1291 = vpop.f32.mrb[0].mxu0
        %v1292 = vadd.f32 0.0, %v1291
        %v1293 = vpop.f32.mrb[0].mxu0
        %v1294 = vadd.f32 0.0, %v1293
        %1295 = vmatprep.mubr.bf16.mxu0 0
        %1296 = vmatmul.mubr.bf16.gmra.mrb[0].mxu0 %v1245
        %v1297 = vpop.f32.mrb[0].mxu0
        %v1298 = vadd.f32 0.0, %v1297
        %v1299 = vpop.f32.mrb[0].mxu0
        %v1300 = vadd.f32 0.0, %v1299
        %v1301 = vpop.f32.mrb[0].mxu0
        %v1302 = vadd.f32 0.0, %v1301
        %v1303 = vpop.f32.mrb[0].mxu0
        %v1304 = vadd.f32 0.0, %v1303
        %1305 = vmatprep.mubr.bf16.mxu0 0
        %1306 = vmatmul.mubr.bf16.gmra.mrb[0].mxu0 %v1248
        %v1307 = vpop.f32.mrb[0].mxu0
        %v1308 = vadd.f32 0.0, %v1307
        %v1309 = vpop.f32.mrb[0].mxu0
        %v1310 = vadd.f32 0.0, %v1309
        %v1311 = vpop.f32.mrb[0].mxu0
        %v1312 = vadd.f32 0.0, %v1311
        %v1313 = vpop.f32.mrb[0].mxu0
        %v1314 = vadd.f32 0.0, %v1313
        %1315 = vmatprep.mubr.bf16.mxu0 0
        %1316 = vmatmul.mubr.bf16.gmra.mrb[0].mxu0 %v1251
        %v1317 = vpop.f32.mrb[0].mxu0
        %v1318 = vadd.f32 0.0, %v1317
        %v1319 = vpop.f32.mrb[0].mxu0
        %v1320 = vadd.f32 0.0, %v1319
        %v1321 = vpop.f32.mrb[0].mxu0
        %v1322 = vadd.f32 0.0, %v1321
        %v1323 = vpop.f32.mrb[0].mxu0
        %v1324 = vadd.f32 0.0, %v1323
        %1325 = vdwg.mxu0
        %v1326 = vpack.c.bf16 %v1292, %v1288
        %v1327 = vpack.c.bf16 %v1294, %v1290
        %v1328 = vpack.c.bf16 %v1302, %v1298
        %v1329 = vpack.c.bf16 %v1304, %v1300
        %v1330 = vpack.c.bf16 %v1312, %v1308
        %v1331 = vpack.c.bf16 %v1314, %v1310
        %v1332 = vpack.c.bf16 %v1322, %v1318
        %v1333 = vpack.c.bf16 %v1324, %v1320
        %v1342 = vunpack.c.l.b16 %v1326
        %v1343 = vunpack.c.l.b16 %v1327
        %v1344 = vunpack.c.h.b16 %v1326
        %v1345 = vunpack.c.h.b16 %v1327
        %v1346 = vunpack.c.l.b16 %v1328
        %v1347 = vunpack.c.l.b16 %v1329
        %v1348 = vunpack.c.h.b16 %v1328
        %v1349 = vunpack.c.h.b16 %v1329
        %v1350 = vunpack.c.l.b16 %v1330
        %v1351 = vunpack.c.l.b16 %v1331
        %v1352 = vunpack.c.h.b16 %v1330
        %v1353 = vunpack.c.h.b16 %v1331
        %v1354 = vunpack.c.l.b16 %v1332
        %v1355 = vunpack.c.l.b16 %v1333
        %v1356 = vunpack.c.h.b16 %v1332
        %v1357 = vunpack.c.h.b16 %v1333
        %v1358 = vpack.c.b16 %v1343, %v1342
        %v1359 = vpack.c.b16 %v1345, %v1344
        %v1360 = vpack.c.b16 %v1347, %v1346
        %v1361 = vpack.c.b16 %v1349, %v1348
        %v1362 = vpack.c.b16 %v1351, %v1350
        %v1363 = vpack.c.b16 %v1353, %v1352
        %v1364 = vpack.c.b16 %v1355, %v1354
        %v1365 = vpack.c.b16 %v1357, %v1356
        %1374 = vst [vmem:[%s425] sm:$0xff] %v1358
        %1375 = vst [vmem:[%s425 + $0x8] sm:$0xff] %v1359
        %1376 = vst [vmem:[%s425 + $0x10] sm:$0xff] %v1360
        %1377 = vst [vmem:[%s425 + $0x18] sm:$0xff] %v1361
        %1378 = vst [vmem:[%s425 + $0x20] sm:$0xff] %v1362
        %1379 = vst [vmem:[%s425 + $0x28] sm:$0xff] %v1363
        %1380 = vst [vmem:[%s425 + $0x30] sm:$0xff] %v1364
        %1381 = vst [vmem:[%s425 + $0x38] sm:$0xff] %v1365
        %v1382 = vld [vmem:[%s7] sm:$0xf]
        %v1383 = vld [vmem:[%s7 + $0x4] sm:$0xf]
        %v1384 = vld [vmem:[%s7 + $0x8] sm:$0xf]
        %v1385 = vld [vmem:[%s7 + $0xc] sm:$0xf]
        %v1386 = vld [vmem:[%s7 + $0x10] sm:$0xf]
        %v1387 = vld [vmem:[%s7 + $0x14] sm:$0xf]
        %v1388 = vld [vmem:[%s7 + $0x18] sm:$0xf]
        %v1389 = vld [vmem:[%s7 + $0x1c] sm:$0xf]
        %v1398 = vunpack.c.l.b16 %v1382
        %v1399 = vunpack.c.l.b16 %v1383
        %v1400 = vunpack.c.l.b16 %v1384
        %v1401 = vunpack.c.l.b16 %v1385
        %v1402 = vunpack.c.l.b16 %v1386
        %v1403 = vunpack.c.l.b16 %v1387
        %v1404 = vunpack.c.l.b16 %v1388
        %v1405 = vunpack.c.l.b16 %v1389
        %v1406 = vpack.c.b16 %v1399, %v1398
        %v1407 = vpack.c.b16 %v1401, %v1400
        %v1408 = vpack.c.b16 %v1403, %v1402
        %v1409 = vpack.c.b16 %v1405, %v1404
        %v1411 = vsel %vm528, %v1406, 0
        %v1414 = vsel %vm528, %v1407, 0
        %v1417 = vsel %vm528, %v1408, 0
        %v1420 = vsel %vm528, %v1409, 0
        %1422 = vmatprep.subr.bf16.mxu0 %v989
        %1423 = vmatpush1.bf16.msra.mxu0 %v988
        %1424 = vmatprep.subr.bf16.mxu0 %v991
        %1425 = vmatpush1.bf16.msra.mxu0 %v990
        %1426 = vmatprep.subr.bf16.mxu0 %v993
        %1427 = vmatpush1.bf16.msra.mxu0 %v992
        %1428 = vmatprep.subr.bf16.mxu0 %v995
        %1429 = vmatpush1.bf16.msra.mxu0 %v994
        %1430 = vmatprep.subr.bf16.mxu0 0
        %1431 = vmatpush1.bf16.msra.mxu0 0
        %1432 = vmatprep.subr.bf16.mxu0 0
        %1433 = vmatpush1.bf16.msra.mxu0 0
        %1434 = vmatprep.subr.bf16.mxu0 0
        %1435 = vmatpush1.bf16.msra.mxu0 0
        %1436 = vmatprep.subr.bf16.mxu0 0
        %1437 = vmatpush1.bf16.msra.mxu0 0
        %1438 = vmatprep.subr.bf16.mxu0 0
        %1439 = vmatpush1.bf16.msra.mxu0 0
        %1440 = vmatprep.subr.bf16.mxu0 0
        %1441 = vmatpush1.bf16.msra.mxu0 0
        %1442 = vmatprep.subr.bf16.mxu0 0
        %1443 = vmatpush1.bf16.msra.mxu0 0
        %1444 = vmatprep.subr.bf16.mxu0 0
        %1445 = vmatpush1.bf16.msra.mxu0 0
        %1446 = vmatprep.subr.bf16.mxu0 0
        %1447 = vmatpush1.bf16.msra.mxu0 0
        %1448 = vmatprep.subr.bf16.mxu0 0
        %1449 = vmatpush1.bf16.msra.mxu0 0
        %1450 = vmatprep.subr.bf16.mxu0 0
        %1451 = vmatpush1.bf16.msra.mxu0 0
        %1452 = vmatprep.subr.bf16.mxu0 0
        %1453 = vmatpush1.bf16.msra.mxu0 0
        %1454 = vmatprep.mubr.bf16.mxu0 0
        %1455 = vmatmul.mubr.bf16.gmra.mrb[0].mxu0 %v1411
        %v1456 = vpop.f32.mrb[0].mxu0
        %v1457 = vadd.f32 0.0, %v1456
        %v1458 = vpop.f32.mrb[0].mxu0
        %v1459 = vadd.f32 0.0, %v1458
        %v1460 = vpop.f32.mrb[0].mxu0
        %v1461 = vadd.f32 0.0, %v1460
        %v1462 = vpop.f32.mrb[0].mxu0
        %v1463 = vadd.f32 0.0, %v1462
        %1464 = vmatprep.mubr.bf16.mxu0 0
        %1465 = vmatmul.mubr.bf16.gmra.mrb[0].mxu0 %v1414
        %v1466 = vpop.f32.mrb[0].mxu0
        %v1467 = vadd.f32 0.0, %v1466
        %v1468 = vpop.f32.mrb[0].mxu0
        %v1469 = vadd.f32 0.0, %v1468
        %v1470 = vpop.f32.mrb[0].mxu0
        %v1471 = vadd.f32 0.0, %v1470
        %v1472 = vpop.f32.mrb[0].mxu0
        %v1473 = vadd.f32 0.0, %v1472
        %1474 = vmatprep.mubr.bf16.mxu0 0
        %1475 = vmatmul.mubr.bf16.gmra.mrb[0].mxu0 %v1417
        %v1476 = vpop.f32.mrb[0].mxu0
        %v1477 = vadd.f32 0.0, %v1476
        %v1478 = vpop.f32.mrb[0].mxu0
        %v1479 = vadd.f32 0.0, %v1478
        %v1480 = vpop.f32.mrb[0].mxu0
        %v1481 = vadd.f32 0.0, %v1480
        %v1482 = vpop.f32.mrb[0].mxu0
        %v1483 = vadd.f32 0.0, %v1482
        %1484 = vmatprep.mubr.bf16.mxu0 0
        %1485 = vmatmul.mubr.bf16.gmra.mrb[0].mxu0 %v1420
        %v1486 = vpop.f32.mrb[0].mxu0
        %v1487 = vadd.f32 0.0, %v1486
        %v1488 = vpop.f32.mrb[0].mxu0
        %v1489 = vadd.f32 0.0, %v1488
        %v1490 = vpop.f32.mrb[0].mxu0
        %v1491 = vadd.f32 0.0, %v1490
        %v1492 = vpop.f32.mrb[0].mxu0
        %v1493 = vadd.f32 0.0, %v1492
        %1494 = vdwg.mxu0
        %v1495 = vpack.c.bf16 %v1461, %v1457
        %v1496 = vpack.c.bf16 %v1463, %v1459
        %v1497 = vpack.c.bf16 %v1471, %v1467
        %v1498 = vpack.c.bf16 %v1473, %v1469
        %v1499 = vpack.c.bf16 %v1481, %v1477
        %v1500 = vpack.c.bf16 %v1483, %v1479
        %v1501 = vpack.c.bf16 %v1491, %v1487
        %v1502 = vpack.c.bf16 %v1493, %v1489
        %vm1503 = vcmask 1040384
        %vm1504 = vsmask.f32 256
        %vm1505 = vmand %vm1503, %vm1504
        %v1506 = vsel %vm1505, 1065369472, 0
        %v1512 = vunpack.c.l.b16 %v1495
        %v1513 = vunpack.c.l.b16 %v1496
        %v1514 = vunpack.c.h.b16 %v1495
        %v1515 = vunpack.c.h.b16 %v1496
        %v1516 = vunpack.c.l.b16 %v1497
        %v1517 = vunpack.c.l.b16 %v1498
        %v1518 = vunpack.c.h.b16 %v1497
        %v1519 = vunpack.c.h.b16 %v1498
        %v1520 = vunpack.c.l.b16 %v1506
        %v1521 = vpack.c.b16 %v1513, %v1512
        %v1522 = vpack.c.b16 %v1515, %v1514
        %v1523 = vpack.c.b16 %v1517, %v1516
        %v1524 = vpack.c.b16 %v1519, %v1518
        %v1525 = vpack.c.b16 %v1520, %v1520
        %1531 = vst [vmem:[%s432] sm:$0xff] %v1521
        %1532 = vst [vmem:[%s432 + $0x8] sm:$0xff] %v1522
        %1533 = vst [vmem:[%s432 + $0x10] sm:$0xff] %v1523
        %1534 = vst [vmem:[%s432 + $0x18] sm:$0xff] %v1524
        %1535 = vst [vmem:[%s432 + $0x20] sm:$0xff] %v1525
        %v1540 = vunpack.c.l.b16 %v1499
        %v1541 = vunpack.c.l.b16 %v1500
        %v1542 = vunpack.c.h.b16 %v1499
        %v1543 = vunpack.c.h.b16 %v1500
        %v1544 = vunpack.c.l.b16 %v1501
        %v1545 = vunpack.c.l.b16 %v1502
        %v1546 = vunpack.c.h.b16 %v1501
        %v1547 = vunpack.c.h.b16 %v1502
        %v1548 = vpack.c.b16 %v1541, %v1540
        %v1549 = vpack.c.b16 %v1543, %v1542
        %v1550 = vpack.c.b16 %v1545, %v1544
        %v1551 = vpack.c.b16 %v1547, %v1546
        %s1556 = scalar_lea.vmem %s432, 40 [#allocation9]
        %1557 = vst [vmem:[%s1556] sm:$0xff] %v1548
        %1558 = vst [vmem:[%s1556 + $0x8] sm:$0xff] %v1549
        %1559 = vst [vmem:[%s1556 + $0x10] sm:$0xff] %v1550
        %1560 = vst [vmem:[%s1556 + $0x18] sm:$0xff] %v1551
        %1561 = vst [vmem:[%s1556 + $0x20] sm:$0xff] %v1525
        %s1562 = sand.u32 %s216, 1
        %s1563 = scalar_lea.sflag [#allocation4], %s1562
        %s1564 = sand.u32 %s216, 1
        %s1565 = smul.addr %s1564, 64
        %s1566 = scalar_lea.vmem [#allocation5], %s1565
        %s1567 = sand.u32 %s35, 1
        %s1568 = scalar_lea.sflag [#allocation7], %s1567
        %s1569 = sand.u32 %s242, 1
        %s1570 = smul.addr %s1569, 64
        %s1571 = scalar_lea.vmem [#allocation6], %s1570
        %s1572 = sand.u32 %s35, 1
        %s1573 = scalar_lea.sflag [#allocation7], %s1572
        %s1574 = sand.u32 %s268, 1
        %s1575 = smul.addr %s1574, 64
        %s1576 = scalar_lea.vmem [#allocation8], %s1575
        %s1577 = sand.u32 %s294, 1
        %s1578 = scalar_lea.sflag [#allocation10], %s1577
        %s1579 = sand.u32 %s294, 1
        %s1580 = smul.addr %s1579, 80
        %s1581 = scalar_lea.vmem [#allocation9], %s1580
        // Predicated region
        $region57: #{tpu_custom_call.1} parent=51 // pred_check
          %p1582 = pneg %p226
        $region58: #{tpu_custom_call.1} parent=51 // pred_check_branch
          %1584 = sbr.rel (%p1582) target = $region60
        $region59: #{tpu_custom_call.1} parent=51 // pred_region
          %s1586 = ssub.s32 1024, 1024
          %1587 = vsyncadd %s1563, %s1586
          %s1588 = smul.addr %s35, 16
          %s1589 = smul.addr %s1588, 64
          %s1590 = scalar_lea.hbm %s8, %s1589
          %s1591 = sshll.u32 %s1566, 4
          %s1592 = int_to_ptr.vmem [resolvable:$true] %s1591
          %1597 = dma.vmem_to_hbm [thread:$0]  %s1592, 1024, %s1590, %s1563, 128, 128, 8
        $region60: #{tpu_custom_call.1} parent=51 // pred_fallthru
          _
        // Predicated region
        $region61: #{tpu_custom_call.1} parent=51 // pred_check
          %p1598 = pneg %p252
        $region62: #{tpu_custom_call.1} parent=51 // pred_check_branch
          %1600 = sbr.rel (%p1598) target = $region64
        $region63: #{tpu_custom_call.1} parent=51 // pred_region
          %s1602 = ssub.s32 1024, 1024
          %1603 = vsyncadd %s1568, %s1602
          %s1604 = smul.addr %s35, 16
          %s1605 = smul.addr %s1604, 64
          %s1606 = scalar_lea.hbm %s9, %s1605
          %s1607 = sshll.u32 %s1571, 4
          %s1608 = int_to_ptr.vmem [resolvable:$true] %s1607
          %1613 = dma.vmem_to_hbm [thread:$0]  %s1608, 1024, %s1606, %s1568, 128, 128, 8
        $region64: #{tpu_custom_call.1} parent=51 // pred_fallthru
          _
        // Predicated region
        $region65: #{tpu_custom_call.1} parent=51 // pred_check
          %p1614 = pneg %p278
        $region66: #{tpu_custom_call.1} parent=51 // pred_check_branch
          %1616 = sbr.rel (%p1614) target = $region68
        $region67: #{tpu_custom_call.1} parent=51 // pred_region
          %s1618 = ssub.s32 1024, 1024
          %1619 = vsyncadd %s1573, %s1618
          %s1620 = smul.addr %s35, 16
          %s1621 = smul.addr %s1620, 64
          %s1622 = scalar_lea.hbm %s10, %s1621
          %s1623 = sshll.u32 %s1576, 4
          %s1624 = int_to_ptr.vmem [resolvable:$true] %s1623
          %1629 = dma.vmem_to_hbm [thread:$0]  %s1624, 1024, %s1622, %s1573, 128, 128, 8
        $region68: #{tpu_custom_call.1} parent=51 // pred_fallthru
          _
        // Predicated region
        $region69: #{tpu_custom_call.1} parent=51 // pred_check
          %p1630 = pneg %p304
        $region70: #{tpu_custom_call.1} parent=51 // pred_check_branch
          %1632 = sbr.rel (%p1630) target = $region72
        $region71: #{tpu_custom_call.1} parent=51 // pred_region
          %s1634 = ssub.s32 1280, 1280
          %1635 = vsyncadd %s1578, %s1634
          %s1636 = smul.addr %s35, 20
          %s1637 = smul.addr %s1636, 64
          %s1638 = scalar_lea.hbm %s11, %s1637
          %s1639 = sshll.u32 %s1581, 4
          %s1640 = int_to_ptr.vmem [resolvable:$true] %s1639
          %1645 = dma.vmem_to_hbm [thread:$0]  %s1640, 1280, %s1638, %s1578, 128, 128, 8
        $region72: #{tpu_custom_call.1} parent=51 // pred_fallthru
          _
      $region52: #{tpu_custom_call.1} parent=5 // pred_fallthru
        _
      %p1646 = scmp.le.s32.totalorder 2, %s30
      // Predicated region
      $region73: #{tpu_custom_call.1} parent=5 // pred_check
        %p1647 = pneg %p1646
      $region74: #{tpu_custom_call.1} parent=5 // pred_check_branch
        %1649 = sbr.rel (%p1647) target = $region76
      $region75: #{tpu_custom_call.1} parent=5 // pred_region
        %s1650 = ssub.s32 %s30, 2
        // Predicated region
        $region77: #{tpu_custom_call.1} parent=75 // pred_check
          %p1651 = pneg %p232
        $region78: #{tpu_custom_call.1} parent=75 // pred_check_branch
          %1653 = sbr.rel (%p1651) target = $region80
        $region79: #{tpu_custom_call.1} parent=75 // pred_region
          %s1654 = sand.u32 %s217, 1
          %s1655 = scalar_lea.sflag [#allocation4], %s1654
          %s1656 = sand.u32 %s217, 1
          %s1657 = smul.addr %s1656, 64
          %s1658 = scalar_lea.vmem [#allocation5], %s1657
          %1659 = dma.done %s1655, 1024
        $region80: #{tpu_custom_call.1} parent=75 // pred_fallthru
          _
        // Predicated region
        $region81: #{tpu_custom_call.1} parent=75 // pred_check
          %p1660 = pneg %p258
        $region82: #{tpu_custom_call.1} parent=75 // pred_check_branch
          %1662 = sbr.rel (%p1660) target = $region84
        $region83: #{tpu_custom_call.1} parent=75 // pred_region
          %s1663 = sand.u32 %s36, 1
          %s1664 = scalar_lea.sflag [#allocation7], %s1663
          %s1665 = sand.u32 %s243, 1
          %s1666 = smul.addr %s1665, 64
          %s1667 = scalar_lea.vmem [#allocation6], %s1666
          %1668 = dma.done %s1664, 1024
        $region84: #{tpu_custom_call.1} parent=75 // pred_fallthru
          _
        // Predicated region
        $region85: #{tpu_custom_call.1} parent=75 // pred_check
          %p1669 = pneg %p284
        $region86: #{tpu_custom_call.1} parent=75 // pred_check_branch
          %1671 = sbr.rel (%p1669) target = $region88
        $region87: #{tpu_custom_call.1} parent=75 // pred_region
          %s1672 = sand.u32 %s36, 1
          %s1673 = scalar_lea.sflag [#allocation7], %s1672
          %s1674 = sand.u32 %s269, 1
          %s1675 = smul.addr %s1674, 64
          %s1676 = scalar_lea.vmem [#allocation8], %s1675
          %1677 = dma.done %s1673, 1024
        $region88: #{tpu_custom_call.1} parent=75 // pred_fallthru
          _
        // Predicated region
        $region89: #{tpu_custom_call.1} parent=75 // pred_check
          %p1678 = pneg %p310
        $region90: #{tpu_custom_call.1} parent=75 // pred_check_branch
          %1680 = sbr.rel (%p1678) target = $region92
        $region91: #{tpu_custom_call.1} parent=75 // pred_region
          %s1681 = sand.u32 %s295, 1
          %s1682 = scalar_lea.sflag [#allocation10], %s1681
          %s1683 = sand.u32 %s295, 1
          %s1684 = smul.addr %s1683, 80
          %s1685 = scalar_lea.vmem [#allocation9], %s1684
          %1686 = dma.done %s1682, 1280
        $region92: #{tpu_custom_call.1} parent=75 // pred_fallthru
          _
      $region76: #{tpu_custom_call.1} parent=5 // pred_fallthru
        _
    $region6: #{tpu_custom_call.1} parent=1 // loop_footer
      %s34 = sadd.s32 1, %s30
    $region7: #{tpu_custom_call.1} parent=1 // loop_footer_branch
      %29 = sbr.rel target = $region3
    $region8: #{tpu_custom_call.1} parent=1 // loop_exit
      _
    %1687 = vsyncpa [#allocation3], 1
    %s1688 = scalar_lea.sflag [#allocation3], 1
    %1689 = vsyncpa %s1688, 1
    %1690 = vsyncpa [#allocation4], 1
    %s1691 = scalar_lea.sflag [#allocation4], 1
    %1692 = vsyncpa %s1691, 1
    %1693 = vsyncpa [#allocation7], 1
    %s1694 = scalar_lea.sflag [#allocation7], 1
    %1695 = vsyncpa %s1694, 1
    %1696 = vsyncpa [#allocation10], 1
    %s1697 = scalar_lea.sflag [#allocation10], 1
    %1698 = vsyncpa %s1697, 1

</llo_original>
